<compile_context>
chip_gen: v5e
topology: v5e:2x2
jax: 0.10.0
libtpu: 0.0.40
codegen_flags: <defaults>
</compile_context>

<pallas_src>
import jax
import jax.numpy as jnp
from jax.experimental import pallas as pl
from jax.experimental.pallas import tpu as pltpu


def _qnet_kernel(x_ref, w1_ref, b1_ref, w2_ref, b2_ref, w3_ref, b3_ref, o_ref):
    # fc1: bf16 MXU matmul, f32 accumulation; bias + ReLU in f32.
    x = x_ref[...].astype(jnp.bfloat16)                                   # (TB, Din)
    h1 = jnp.dot(x, w1_ref[...], preferred_element_type=jnp.float32) + b1_ref[...]
    h1 = jnp.maximum(h1, 0.0)                                             # (TB, 512) f32

    # fc2: bf16 MXU matmul, f32 accumulation.
    h2 = jnp.dot(h1.astype(jnp.bfloat16), w2_ref[...],
                 preferred_element_type=jnp.float32) + b2_ref[...]
    h2 = jnp.maximum(h2, 0.0)                                             # (TB, 256) f32

    # fc3 (256 -> 1): VPU multiply + XLU cross-lane reduce (lane-dense math,
    # no 1-column MXU pass).
    out = jnp.sum(h2 * w3_ref[...], axis=-1, keepdims=True) + b3_ref[...]  # (TB, 1)
    o_ref[...] = out.astype(o_ref.dtype)


def q_network_forward(x, params, *, tb=256):
    """x: (B, Din) float32. params: w1/w2 bf16 (in,out), w3 f32 (1,256), biases f32 (1,out)."""
    B, din = x.shape
    w1, b1, w2, b2, w3, b3 = (params[k] for k in ("w1", "b1", "w2", "b2", "w3", "b3"))
    d1, d2 = w1.shape[1], w2.shape[1]

    # Pad batch to a multiple of the tile so every MXU pass has full rows.
    pb = tb * pl.cdiv(B, tb)
    if pb != B:
        x = jnp.pad(x, ((0, pb - B), (0, 0)))

    def resident(shape):
        # Same block index every grid step -> stays in VMEM, no re-DMA.
        return pl.BlockSpec(shape, lambda i: (0, 0))

    flops = 2 * pb * (din * d1 + d1 * d2 + d2)
    bytes_accessed = (
        x.size * x.dtype.itemsize
        + sum(p.size * p.dtype.itemsize for p in (w1, b1, w2, b2, w3, b3))
        + pb * 4  # output
    )

    out = pl.pallas_call(
        _qnet_kernel,
        out_shape=jax.ShapeDtypeStruct((pb, 1), jnp.float32),
        grid=(pb // tb,),
        in_specs=[
            pl.BlockSpec((tb, din), lambda i: (i, 0)),   # x: batch-tiled, pipelined
            resident(w1.shape), resident(b1.shape),
            resident(w2.shape), resident(b2.shape),
            resident(w3.shape), resident(b3.shape),
        ],
        out_specs=pl.BlockSpec((tb, 1), lambda i: (i, 0)),
        compiler_params=pltpu.CompilerParams(
            dimension_semantics=("parallel",),           # megacore split on v7x
        ),
        cost_estimate=pl.CostEstimate(
            flops=flops, transcendentals=0, bytes_accessed=bytes_accessed),
    )(x, w1, b1, w2, b2, w3, b3)
    return out[:B]


def init_params(key, in_features):
    """PyTorch-style init U(-1/sqrt(fan_in), 1/sqrt(fan_in)).
    Weights pre-transposed to (in, out); fc1/fc2 stored bf16 (MXU operands),
    fc3 stored f32 as a (1, 256) row for the VPU reduction."""
    def linear(key, fan_in, fan_out, w_dtype):
        kw, kb = jax.random.split(key)
        bound = 1.0 / jnp.sqrt(jnp.float32(fan_in))
        w = jax.random.uniform(kw, (fan_in, fan_out), jnp.float32, -bound, bound)
        b = jax.random.uniform(kb, (1, fan_out), jnp.float32, -bound, bound)
        return w.astype(w_dtype), b

    k1, k2, k3 = jax.random.split(key, 3)
    w1, b1 = linear(k1, in_features, 512, jnp.bfloat16)
    w2, b2 = linear(k2, 512, 256, jnp.bfloat16)
    w3, b3 = linear(k3, 256, 1, jnp.float32)
    return {"w1": w1, "b1": b1, "w2": w2, "b2": b2, "w3": w3.T, "b3": b3}


def q_network_ref(x, params):
    """Pure-JAX reference with the same bf16-operand / f32-accumulate math."""
    h1 = jnp.maximum(
        jnp.dot(x.astype(jnp.bfloat16), params["w1"],
                preferred_element_type=jnp.float32) + params["b1"], 0.0)
    h2 = jnp.maximum(
        jnp.dot(h1.astype(jnp.bfloat16), params["w2"],
                preferred_element_type=jnp.float32) + params["b2"], 0.0)
    return jnp.sum(h2 * params["w3"], axis=-1, keepdims=True) + params["b3"]


if __name__ == "__main__":
    key = jax.random.PRNGKey(0)
    k_x, k_p = jax.random.split(key)

    batch, in_features = 8, 32  # LazyLinear infers in_features from first input
    x = jax.random.normal(k_x, (batch, in_features), jnp.float32)
    params = init_params(k_p, in_features)

    out = q_network_forward(x, params)
    out = jax.block_until_ready(out)

    ref = q_network_ref(x, params)
    assert out.shape == (batch, 1)
    assert jnp.allclose(out, ref, atol=1e-3, rtol=1e-3), (
        f"max abs err {jnp.max(jnp.abs(out - ref))}")

    print("KERNEL_OK")
</pallas_src>

<mosaic_0001>
module attributes {stable_mosaic.version = 11 : i64} {
  func.func @_qnet_kernel(%arg0: i32, %arg1: memref<256x32xf32, #tpu.memory_space<vmem>>, %arg2: memref<32x512xbf16, #tpu.memory_space<vmem>>, %arg3: memref<1x512xf32, #tpu.memory_space<vmem>>, %arg4: memref<512x256xbf16, #tpu.memory_space<vmem>>, %arg5: memref<1x256xf32, #tpu.memory_space<vmem>>, %arg6: memref<1x256xf32, #tpu.memory_space<vmem>>, %arg7: memref<1x1xf32, #tpu.memory_space<vmem>>, %arg8: memref<256x1xf32, #tpu.memory_space<vmem>>) attributes {dimension_semantics = [#tpu.dimension_semantics<parallel>], iteration_bounds = array<i64: 1>, scalar_prefetch = 0 : i64, scratch_operands = 0 : i64, tpu.core_type = #tpu.core_type<tc>, window_params = [{transform_indices = @transform_0, window_bounds = array<i64: 256, 32>}, {pipeline_mode = #tpu.pipeline_mode<synchronous>, transform_indices = @transform_1, window_bounds = array<i64: 32, 512>}, {pipeline_mode = #tpu.pipeline_mode<synchronous>, transform_indices = @transform_2, window_bounds = array<i64: 1, 512>}, {pipeline_mode = #tpu.pipeline_mode<synchronous>, transform_indices = @transform_3, window_bounds = array<i64: 512, 256>}, {pipeline_mode = #tpu.pipeline_mode<synchronous>, transform_indices = @transform_4, window_bounds = array<i64: 1, 256>}, {pipeline_mode = #tpu.pipeline_mode<synchronous>, transform_indices = @transform_5, window_bounds = array<i64: 1, 256>}, {pipeline_mode = #tpu.pipeline_mode<synchronous>, transform_indices = @transform_6, window_bounds = array<i64: 1, 1>}, {transform_indices = @transform_7, window_bounds = array<i64: 256, 1>}]} {
    %c0 = arith.constant 0 : index
    %c0_0 = arith.constant 0 : index
    %0 = vector.load %arg1[%c0, %c0_0] : memref<256x32xf32, #tpu.memory_space<vmem>>, vector<256x32xf32>
    %1 = arith.truncf %0 : vector<256x32xf32> to vector<256x32xbf16>
    %c0_1 = arith.constant 0 : index
    %c0_2 = arith.constant 0 : index
    %2 = vector.load %arg2[%c0_1, %c0_2] : memref<32x512xbf16, #tpu.memory_space<vmem>>, vector<32x512xbf16>
    %cst = arith.constant dense<0.000000e+00> : vector<256x512xf32>
    %3 = tpu.matmul %1, %2, %cst {dimension_numbers = #tpu.dot_dimension_numbers<[1], [0], [0], [1], [0, 0, 1, 1], [], []>} : vector<256x32xbf16>, vector<32x512xbf16>, vector<256x512xf32> -> vector<256x512xf32>
    %c0_3 = arith.constant 0 : index
    %c0_4 = arith.constant 0 : index
    %4 = vector.load %arg3[%c0_3, %c0_4] : memref<1x512xf32, #tpu.memory_space<vmem>>, vector<1x512xf32>
    %5 = vector.broadcast %4 : vector<1x512xf32> to vector<256x512xf32>
    %6 = arith.addf %3, %5 : vector<256x512xf32>
    %cst_5 = arith.constant 0.000000e+00 : f32
    %7 = vector.broadcast %cst_5 : f32 to vector<256x512xf32>
    %8 = arith.maximumf %6, %7 : vector<256x512xf32>
    %9 = arith.truncf %8 : vector<256x512xf32> to vector<256x512xbf16>
    %c0_6 = arith.constant 0 : index
    %c0_7 = arith.constant 0 : index
    %10 = vector.load %arg4[%c0_6, %c0_7] : memref<512x256xbf16, #tpu.memory_space<vmem>>, vector<512x256xbf16>
    %cst_8 = arith.constant dense<0.000000e+00> : vector<256x256xf32>
    %11 = tpu.matmul %9, %10, %cst_8 {dimension_numbers = #tpu.dot_dimension_numbers<[1], [0], [0], [1], [0, 0, 1, 1], [], []>} : vector<256x512xbf16>, vector<512x256xbf16>, vector<256x256xf32> -> vector<256x256xf32>
    %c0_9 = arith.constant 0 : index
    %c0_10 = arith.constant 0 : index
    %12 = vector.load %arg5[%c0_9, %c0_10] : memref<1x256xf32, #tpu.memory_space<vmem>>, vector<1x256xf32>
    %13 = vector.broadcast %12 : vector<1x256xf32> to vector<256x256xf32>
    %14 = arith.addf %11, %13 : vector<256x256xf32>
    %cst_11 = arith.constant 0.000000e+00 : f32
    %15 = vector.broadcast %cst_11 : f32 to vector<256x256xf32>
    %16 = arith.maximumf %14, %15 : vector<256x256xf32>
    %c0_12 = arith.constant 0 : index
    %c0_13 = arith.constant 0 : index
    %17 = vector.load %arg6[%c0_12, %c0_13] : memref<1x256xf32, #tpu.memory_space<vmem>>, vector<1x256xf32>
    %18 = vector.broadcast %17 : vector<1x256xf32> to vector<256x256xf32>
    %19 = arith.mulf %16, %18 : vector<256x256xf32>
    %cst_14 = arith.constant dense<0.000000e+00> : vector<256xf32>
    %20 = vector.multi_reduction <add>, %19, %cst_14 [1] : vector<256x256xf32> to vector<256xf32>
    %21 = vector.shape_cast %20 : vector<256xf32> to vector<256x1xf32>
    %c0_15 = arith.constant 0 : index
    %c0_16 = arith.constant 0 : index
    %22 = vector.load %arg7[%c0_15, %c0_16] : memref<1x1xf32, #tpu.memory_space<vmem>>, vector<1x1xf32>
    %23 = vector.broadcast %22 : vector<1x1xf32> to vector<256x1xf32>
    %24 = arith.addf %21, %23 : vector<256x1xf32>
    %c0_17 = arith.constant 0 : index
    %c0_18 = arith.constant 0 : index
    %25 = vector.load %arg8[%c0_17, %c0_18] : memref<256x1xf32, #tpu.memory_space<vmem>>, vector<256x1xf32>
    tpu.vector_store %arg8[%c0_17, %c0_18], %24 {strides = array<i32>} : memref<256x1xf32, #tpu.memory_space<vmem>>, vector<256x1xf32>,
    return
  }
  func.func @transform_0(%arg0: i32) -> (i32, i32) {
    %c0_i32 = arith.constant 0 : i32
    %c0_i32_0 = arith.constant 0 : i32
    return %arg0, %c0_i32 : i32, i32
  }
  func.func @transform_1(%arg0: i32) -> (i32, i32) {
    %c0_i32 = arith.constant 0 : i32
    %c0_i32_0 = arith.constant 0 : i32
    %c0_i32_1 = arith.constant 0 : i32
    return %c0_i32, %c0_i32_0 : i32, i32
  }
  func.func @transform_2(%arg0: i32) -> (i32, i32) {
    %c0_i32 = arith.constant 0 : i32
    %c0_i32_0 = arith.constant 0 : i32
    %c0_i32_1 = arith.constant 0 : i32
    return %c0_i32, %c0_i32_0 : i32, i32
  }
  func.func @transform_3(%arg0: i32) -> (i32, i32) {
    %c0_i32 = arith.constant 0 : i32
    %c0_i32_0 = arith.constant 0 : i32
    %c0_i32_1 = arith.constant 0 : i32
    return %c0_i32, %c0_i32_0 : i32, i32
  }
  func.func @transform_4(%arg0: i32) -> (i32, i32) {
    %c0_i32 = arith.constant 0 : i32
    %c0_i32_0 = arith.constant 0 : i32
    %c0_i32_1 = arith.constant 0 : i32
    return %c0_i32, %c0_i32_0 : i32, i32
  }
  func.func @transform_5(%arg0: i32) -> (i32, i32) {
    %c0_i32 = arith.constant 0 : i32
    %c0_i32_0 = arith.constant 0 : i32
    %c0_i32_1 = arith.constant 0 : i32
    return %c0_i32, %c0_i32_0 : i32, i32
  }
  func.func @transform_6(%arg0: i32) -> (i32, i32) {
    %c0_i32 = arith.constant 0 : i32
    %c0_i32_0 = arith.constant 0 : i32
    %c0_i32_1 = arith.constant 0 : i32
    return %c0_i32, %c0_i32_0 : i32, i32
  }
  func.func @transform_7(%arg0: i32) -> (i32, i32) {
    %c0_i32 = arith.constant 0 : i32
    %c0_i32_0 = arith.constant 0 : i32
    return %arg0, %c0_i32 : i32, i32
  }
}

</mosaic_0001>

<llo_original>
// kernel: tpu_custom_call.1
$region0: #{tpu_custom_call.1}
  #allocation0 [shape = 'u32[]', space=smem, size = 0x4, offset = 0x4, fixed_abs, tag = 'smem constant byte address 0x4 - core index']
  #allocation1 [shape = 'u32[72,128]{1,0:T(1,128)}', space=vmem, size = 0x9000, scoped, tag = 'internal scratch']
  #allocation2 [shape = 'f32[1,1]{1,0:T(1,128)S(1)}', space=vmem, size = 0x200, scoped, tag = 'scoped memory for tpu_custom_call.1']
  %s0 = inlined_call_operand.vmem [shape: f32[256,32], index: 0, kind: input, shape index: {}]
  %s1 = inlined_call_operand.vmem [shape: bf16[32,512], index: 1, kind: input, shape index: {}]
  %s2 = inlined_call_operand.vmem [shape: f32[1,512], index: 2, kind: input, shape index: {}]
  %s3 = inlined_call_operand.hbm [shape: bf16[512,256], index: 3, kind: input, shape index: {}]
  %s4 = inlined_call_operand.vmem [shape: f32[1,256], index: 4, kind: input, shape index: {}]
  %s5 = inlined_call_operand.vmem [shape: f32[1,256], index: 5, kind: input, shape index: {}]
  %s6 = inlined_call_operand.<no memory space> [shape: f32[1,1], index: 6, kind: input, shape index: {}]
  %s7 = inlined_call_operand.vmem [shape: f32[256,1], index: 7, kind: output, shape index: {}]
  %s8 = sld [smem:[#allocation0]]
  $region42: #{tpu_custom_call.1} parent=0
    _
  %s10 = ssub.s32 1, %s8
  %s11 = scalar_select 0, %s10, %s8
  %v12 = vstv %s6
  %13 = vst [vmem:[#allocation2] sm:$0x1] %v12
  $region1: #{tpu_custom_call.1} parent=0
    #allocation3 [shape = 'u8[262144]{0}', space=vmem, size = 0x40000, scoped, tag = 'input window, operand 3, single buffered']
    #allocation4 [shape = 's32[1]{0}', space=sflag, size = 0x4, scoped, tag = 'scoped memory for tpu_custom_call.1']
    %14 = vsyncpa [#allocation4], 0
    // Predicated region
    $region2: #{tpu_custom_call.1} parent=1 // pred_check
      _
    $region3: #{tpu_custom_call.1} parent=1 // pred_check_branch
      %16 = sbr.rel (0) target = $region5
    $region4: #{tpu_custom_call.1} parent=1 // pred_region
      _
    $region5: #{tpu_custom_call.1} parent=1 // pred_fallthru
      _
    // Predicated region
    $region6: #{tpu_custom_call.1} parent=1 // pred_check
      _
    $region7: #{tpu_custom_call.1} parent=1 // pred_check_branch
      %18 = sbr.rel (0) target = $region9
    $region8: #{tpu_custom_call.1} parent=1 // pred_region
      _
    $region9: #{tpu_custom_call.1} parent=1 // pred_fallthru
      _
    // Predicated region
    $region10: #{tpu_custom_call.1} parent=1 // pred_check
      _
    $region11: #{tpu_custom_call.1} parent=1 // pred_check_branch
      %20 = sbr.rel (0) target = $region13
    $region12: #{tpu_custom_call.1} parent=1 // pred_region
      _
    $region13: #{tpu_custom_call.1} parent=1 // pred_fallthru
      _
    // Predicated region
    $region14: #{tpu_custom_call.1} parent=1 // pred_check
      _
    $region15: #{tpu_custom_call.1} parent=1 // pred_check_branch
      %22 = sbr.rel (0) target = $region17
    $region16: #{tpu_custom_call.1} parent=1 // pred_region
      %24 = vsyncadd [#allocation4], 0
      %s25 = sshll.u32 %s3, 4
      %s26 = int_to_ptr.hbm [resolvable:$true] %s25
      %s27 = sshll.u32 [#allocation3], 4
      %s28 = int_to_ptr.vmem [resolvable:$true] %s27
      %33 = dma.hbm_to_vmem [thread:$0]  %s26, 8192, %s28, [#allocation4], 128, 128, 8
    $region17: #{tpu_custom_call.1} parent=1 // pred_fallthru
      _
    // Predicated region
    $region18: #{tpu_custom_call.1} parent=1 // pred_check
      _
    $region19: #{tpu_custom_call.1} parent=1 // pred_check_branch
      %35 = sbr.rel (0) target = $region21
    $region20: #{tpu_custom_call.1} parent=1 // pred_region
      _
    $region21: #{tpu_custom_call.1} parent=1 // pred_fallthru
      _
    // Predicated region
    $region22: #{tpu_custom_call.1} parent=1 // pred_check
      _
    $region23: #{tpu_custom_call.1} parent=1 // pred_check_branch
      %37 = sbr.rel (0) target = $region25
    $region24: #{tpu_custom_call.1} parent=1 // pred_region
      _
    $region25: #{tpu_custom_call.1} parent=1 // pred_fallthru
      _
    // Predicated region
    $region26: #{tpu_custom_call.1} parent=1 // pred_check
      _
    $region27: #{tpu_custom_call.1} parent=1 // pred_check_branch
      %39 = sbr.rel (0) target = $region29
    $region28: #{tpu_custom_call.1} parent=1 // pred_region
      _
    $region29: #{tpu_custom_call.1} parent=1 // pred_fallthru
      _
    // Predicated region
    $region30: #{tpu_custom_call.1} parent=1 // pred_check
      _
    $region31: #{tpu_custom_call.1} parent=1 // pred_check_branch
      %41 = sbr.rel (0) target = $region33
    $region32: #{tpu_custom_call.1} parent=1 // pred_region
      %43 = dma.done [#allocation4], 8192
    $region33: #{tpu_custom_call.1} parent=1 // pred_fallthru
      _
    %v45 = vld [vmem:[%s0] sm:$0xff]
    %v46 = vld [vmem:[%s0 + $0x8] sm:$0xff]
    %v47 = vld [vmem:[%s0 + $0x10] sm:$0xff]
    %v48 = vld [vmem:[%s0 + $0x18] sm:$0xff]
    %v49 = vld [vmem:[%s0 + $0x20] sm:$0xff]
    %v50 = vld [vmem:[%s0 + $0x28] sm:$0xff]
    %v51 = vld [vmem:[%s0 + $0x30] sm:$0xff]
    %v52 = vld [vmem:[%s0 + $0x38] sm:$0xff]
    %v53 = vld [vmem:[%s0 + $0x40] sm:$0xff]
    %v54 = vld [vmem:[%s0 + $0x48] sm:$0xff]
    %v55 = vld [vmem:[%s0 + $0x50] sm:$0xff]
    %v56 = vld [vmem:[%s0 + $0x58] sm:$0xff]
    %v57 = vld [vmem:[%s0 + $0x60] sm:$0xff]
    %v58 = vld [vmem:[%s0 + $0x68] sm:$0xff]
    %v59 = vld [vmem:[%s0 + $0x70] sm:$0xff]
    %v60 = vld [vmem:[%s0 + $0x78] sm:$0xff]
    %v61 = vld [vmem:[%s0 + $0x80] sm:$0xff]
    %v62 = vld [vmem:[%s0 + $0x88] sm:$0xff]
    %v63 = vld [vmem:[%s0 + $0x90] sm:$0xff]
    %v64 = vld [vmem:[%s0 + $0x98] sm:$0xff]
    %v65 = vld [vmem:[%s0 + $0xa0] sm:$0xff]
    %v66 = vld [vmem:[%s0 + $0xa8] sm:$0xff]
    %v67 = vld [vmem:[%s0 + $0xb0] sm:$0xff]
    %v68 = vld [vmem:[%s0 + $0xb8] sm:$0xff]
    %v69 = vld [vmem:[%s0 + $0xc0] sm:$0xff]
    %v70 = vld [vmem:[%s0 + $0xc8] sm:$0xff]
    %v71 = vld [vmem:[%s0 + $0xd0] sm:$0xff]
    %v72 = vld [vmem:[%s0 + $0xd8] sm:$0xff]
    %v73 = vld [vmem:[%s0 + $0xe0] sm:$0xff]
    %v74 = vld [vmem:[%s0 + $0xe8] sm:$0xff]
    %v75 = vld [vmem:[%s0 + $0xf0] sm:$0xff]
    %v76 = vld [vmem:[%s0 + $0xf8] sm:$0xff]
    %v77 = vpack.c.bf16 %v46, %v45
    %v78 = vpack.c.bf16 %v48, %v47
    %v79 = vpack.c.bf16 %v50, %v49
    %v80 = vpack.c.bf16 %v52, %v51
    %v81 = vpack.c.bf16 %v54, %v53
    %v82 = vpack.c.bf16 %v56, %v55
    %v83 = vpack.c.bf16 %v58, %v57
    %v84 = vpack.c.bf16 %v60, %v59
    %v85 = vpack.c.bf16 %v62, %v61
    %v86 = vpack.c.bf16 %v64, %v63
    %v87 = vpack.c.bf16 %v66, %v65
    %v88 = vpack.c.bf16 %v68, %v67
    %v89 = vpack.c.bf16 %v70, %v69
    %v90 = vpack.c.bf16 %v72, %v71
    %v91 = vpack.c.bf16 %v74, %v73
    %v92 = vpack.c.bf16 %v76, %v75
    %v93 = vld [vmem:[%s1] sm:$0xff]
    %v94 = vld [vmem:[%s1 + $0x8] sm:$0xff]
    %v95 = vld [vmem:[%s1 + $0x10] sm:$0xff]
    %v96 = vld [vmem:[%s1 + $0x18] sm:$0xff]
    %v97 = vld [vmem:[%s1 + $0x20] sm:$0xff]
    %v98 = vld [vmem:[%s1 + $0x28] sm:$0xff]
    %v99 = vld [vmem:[%s1 + $0x30] sm:$0xff]
    %v100 = vld [vmem:[%s1 + $0x38] sm:$0xff]
    %v101 = vld [vmem:[%s2] sm:$0xf]
    %v103 = vperm.slane %v101, 0
    %v104 = vperm.slane %v101, 1
    %v105 = vperm.slane %v101, 2
    %v106 = vperm.slane %v101, 3
    %v119 = vunpack.c.l.b16 %v93
    %v120 = vunpack.c.h.b16 %v93
    %v121 = vunpack.c.l.b16 %v94
    %v122 = vunpack.c.h.b16 %v94
    %v123 = vunpack.c.l.b16 %v95
    %v124 = vunpack.c.h.b16 %v95
    %v125 = vunpack.c.l.b16 %v96
    %v126 = vunpack.c.h.b16 %v96
    %v127 = vunpack.c.l.b16 %v97
    %v128 = vunpack.c.h.b16 %v97
    %v129 = vunpack.c.l.b16 %v98
    %v130 = vunpack.c.h.b16 %v98
    %v131 = vunpack.c.l.b16 %v99
    %v132 = vunpack.c.h.b16 %v99
    %v133 = vunpack.c.l.b16 %v100
    %v134 = vunpack.c.h.b16 %v100
    %v135 = vpack.c.b16 %v123, %v119
    %v136 = vpack.c.b16 %v124, %v120
    %v137 = vpack.c.b16 %v125, %v121
    %v138 = vpack.c.b16 %v126, %v122
    %v139 = vpack.c.b16 %v131, %v127
    %v140 = vpack.c.b16 %v132, %v128
    %v141 = vpack.c.b16 %v133, %v129
    %v142 = vpack.c.b16 %v134, %v130
    %vm151 = vcmask 261120
    %v153 = vsel %vm151, %v77, 0
    %v156 = vsel %vm151, %v78, 0
    %v159 = vsel %vm151, %v79, 0
    %v162 = vsel %vm151, %v80, 0
    %v165 = vsel %vm151, %v81, 0
    %v168 = vsel %vm151, %v82, 0
    %v171 = vsel %vm151, %v83, 0
    %v174 = vsel %vm151, %v84, 0
    %v177 = vsel %vm151, %v85, 0
    %v180 = vsel %vm151, %v86, 0
    %v183 = vsel %vm151, %v87, 0
    %v186 = vsel %vm151, %v88, 0
    %v189 = vsel %vm151, %v89, 0
    %v192 = vsel %vm151, %v90, 0
    %v195 = vsel %vm151, %v91, 0
    %v198 = vsel %vm151, %v92, 0
    %200 = vmatpush.bf16.msra.mxu0 0
    %201 = vmatpush.bf16.msra.mxu0 0
    %202 = vmatpush.bf16.msra.mxu0 0
    %203 = vmatpush.bf16.msra.mxu0 0
    %204 = vmatpush.bf16.msra.mxu0 0
    %205 = vmatpush.bf16.msra.mxu0 0
    %206 = vmatpush.bf16.msra.mxu0 %v139
    %207 = vmatpush.bf16.msra.mxu0 %v135
    %208 = vmatmul.bf16.gmra.mxu0 %v153
    %v209 = vpop.f32.mrf.mxu0
    %v210 = vadd.f32 %v103, %v209
    %v211 = vpop.f32.mrf.mxu0
    %v212 = vadd.f32 %v103, %v211
    %213 = vmatmul.bf16.gmra.mxu0 %v156
    %v214 = vpop.f32.mrf.mxu0
    %v215 = vadd.f32 %v103, %v214
    %v216 = vpop.f32.mrf.mxu0
    %v217 = vadd.f32 %v103, %v216
    %218 = vmatmul.bf16.gmra.mxu0 %v159
    %v219 = vpop.f32.mrf.mxu0
    %v220 = vadd.f32 %v103, %v219
    %v221 = vpop.f32.mrf.mxu0
    %v222 = vadd.f32 %v103, %v221
    %223 = vmatmul.bf16.gmra.mxu0 %v162
    %v224 = vpop.f32.mrf.mxu0
    %v225 = vadd.f32 %v103, %v224
    %v226 = vpop.f32.mrf.mxu0
    %v227 = vadd.f32 %v103, %v226
    %228 = vmatmul.bf16.gmra.mxu0 %v165
    %v229 = vpop.f32.mrf.mxu0
    %v230 = vadd.f32 %v103, %v229
    %v231 = vpop.f32.mrf.mxu0
    %v232 = vadd.f32 %v103, %v231
    %233 = vmatmul.bf16.gmra.mxu0 %v168
    %v234 = vpop.f32.mrf.mxu0
    %v235 = vadd.f32 %v103, %v234
    %v236 = vpop.f32.mrf.mxu0
    %v237 = vadd.f32 %v103, %v236
    %238 = vmatmul.bf16.gmra.mxu0 %v171
    %v239 = vpop.f32.mrf.mxu0
    %v240 = vadd.f32 %v103, %v239
    %v241 = vpop.f32.mrf.mxu0
    %v242 = vadd.f32 %v103, %v241
    %243 = vmatmul.bf16.gmra.mxu0 %v174
    %v244 = vpop.f32.mrf.mxu0
    %v245 = vadd.f32 %v103, %v244
    %v246 = vpop.f32.mrf.mxu0
    %v247 = vadd.f32 %v103, %v246
    %248 = vmatmul.bf16.gmra.mxu0 %v177
    %v249 = vpop.f32.mrf.mxu0
    %v250 = vadd.f32 %v103, %v249
    %v251 = vpop.f32.mrf.mxu0
    %v252 = vadd.f32 %v103, %v251
    %253 = vmatmul.bf16.gmra.mxu0 %v180
    %v254 = vpop.f32.mrf.mxu0
    %v255 = vadd.f32 %v103, %v254
    %v256 = vpop.f32.mrf.mxu0
    %v257 = vadd.f32 %v103, %v256
    %258 = vmatmul.bf16.gmra.mxu0 %v183
    %v259 = vpop.f32.mrf.mxu0
    %v260 = vadd.f32 %v103, %v259
    %v261 = vpop.f32.mrf.mxu0
    %v262 = vadd.f32 %v103, %v261
    %263 = vmatmul.bf16.gmra.mxu0 %v186
    %v264 = vpop.f32.mrf.mxu0
    %v265 = vadd.f32 %v103, %v264
    %v266 = vpop.f32.mrf.mxu0
    %v267 = vadd.f32 %v103, %v266
    %268 = vmatmul.bf16.gmra.mxu0 %v189
    %v269 = vpop.f32.mrf.mxu0
    %v270 = vadd.f32 %v103, %v269
    %v271 = vpop.f32.mrf.mxu0
    %v272 = vadd.f32 %v103, %v271
    %273 = vmatmul.bf16.gmra.mxu0 %v192
    %v274 = vpop.f32.mrf.mxu0
    %v275 = vadd.f32 %v103, %v274
    %v276 = vpop.f32.mrf.mxu0
    %v277 = vadd.f32 %v103, %v276
    %278 = vmatmul.bf16.gmra.mxu0 %v195
    %v279 = vpop.f32.mrf.mxu0
    %v280 = vadd.f32 %v103, %v279
    %v281 = vpop.f32.mrf.mxu0
    %v282 = vadd.f32 %v103, %v281
    %283 = vmatmul.bf16.gmra.mxu0 %v198
    %v284 = vpop.f32.mrf.mxu0
    %v285 = vadd.f32 %v103, %v284
    %v286 = vpop.f32.mrf.mxu0
    %v287 = vadd.f32 %v103, %v286
    %288 = vdwg.mxu0
    %289 = vmatpush.bf16.msra.mxu0 0
    %290 = vmatpush.bf16.msra.mxu0 0
    %291 = vmatpush.bf16.msra.mxu0 0
    %292 = vmatpush.bf16.msra.mxu0 0
    %293 = vmatpush.bf16.msra.mxu0 0
    %294 = vmatpush.bf16.msra.mxu0 0
    %295 = vmatpush.bf16.msra.mxu0 %v140
    %296 = vmatpush.bf16.msra.mxu0 %v136
    %297 = vmatmul.bf16.gmra.mxu0 %v153
    %v298 = vpop.f32.mrf.mxu0
    %v299 = vadd.f32 %v104, %v298
    %v300 = vpop.f32.mrf.mxu0
    %v301 = vadd.f32 %v104, %v300
    %302 = vmatmul.bf16.gmra.mxu0 %v156
    %v303 = vpop.f32.mrf.mxu0
    %v304 = vadd.f32 %v104, %v303
    %v305 = vpop.f32.mrf.mxu0
    %v306 = vadd.f32 %v104, %v305
    %307 = vmatmul.bf16.gmra.mxu0 %v159
    %v308 = vpop.f32.mrf.mxu0
    %v309 = vadd.f32 %v104, %v308
    %v310 = vpop.f32.mrf.mxu0
    %v311 = vadd.f32 %v104, %v310
    %312 = vmatmul.bf16.gmra.mxu0 %v162
    %v313 = vpop.f32.mrf.mxu0
    %v314 = vadd.f32 %v104, %v313
    %v315 = vpop.f32.mrf.mxu0
    %v316 = vadd.f32 %v104, %v315
    %317 = vmatmul.bf16.gmra.mxu0 %v165
    %v318 = vpop.f32.mrf.mxu0
    %v319 = vadd.f32 %v104, %v318
    %v320 = vpop.f32.mrf.mxu0
    %v321 = vadd.f32 %v104, %v320
    %322 = vmatmul.bf16.gmra.mxu0 %v168
    %v323 = vpop.f32.mrf.mxu0
    %v324 = vadd.f32 %v104, %v323
    %v325 = vpop.f32.mrf.mxu0
    %v326 = vadd.f32 %v104, %v325
    %327 = vmatmul.bf16.gmra.mxu0 %v171
    %v328 = vpop.f32.mrf.mxu0
    %v329 = vadd.f32 %v104, %v328
    %v330 = vpop.f32.mrf.mxu0
    %v331 = vadd.f32 %v104, %v330
    %332 = vmatmul.bf16.gmra.mxu0 %v174
    %v333 = vpop.f32.mrf.mxu0
    %v334 = vadd.f32 %v104, %v333
    %v335 = vpop.f32.mrf.mxu0
    %v336 = vadd.f32 %v104, %v335
    %337 = vmatmul.bf16.gmra.mxu0 %v177
    %v338 = vpop.f32.mrf.mxu0
    %v339 = vadd.f32 %v104, %v338
    %v340 = vpop.f32.mrf.mxu0
    %v341 = vadd.f32 %v104, %v340
    %342 = vmatmul.bf16.gmra.mxu0 %v180
    %v343 = vpop.f32.mrf.mxu0
    %v344 = vadd.f32 %v104, %v343
    %v345 = vpop.f32.mrf.mxu0
    %v346 = vadd.f32 %v104, %v345
    %347 = vmatmul.bf16.gmra.mxu0 %v183
    %v348 = vpop.f32.mrf.mxu0
    %v349 = vadd.f32 %v104, %v348
    %v350 = vpop.f32.mrf.mxu0
    %v351 = vadd.f32 %v104, %v350
    %352 = vmatmul.bf16.gmra.mxu0 %v186
    %v353 = vpop.f32.mrf.mxu0
    %v354 = vadd.f32 %v104, %v353
    %v355 = vpop.f32.mrf.mxu0
    %v356 = vadd.f32 %v104, %v355
    %357 = vmatmul.bf16.gmra.mxu0 %v189
    %v358 = vpop.f32.mrf.mxu0
    %v359 = vadd.f32 %v104, %v358
    %v360 = vpop.f32.mrf.mxu0
    %v361 = vadd.f32 %v104, %v360
    %362 = vmatmul.bf16.gmra.mxu0 %v192
    %v363 = vpop.f32.mrf.mxu0
    %v364 = vadd.f32 %v104, %v363
    %v365 = vpop.f32.mrf.mxu0
    %v366 = vadd.f32 %v104, %v365
    %367 = vmatmul.bf16.gmra.mxu0 %v195
    %v368 = vpop.f32.mrf.mxu0
    %v369 = vadd.f32 %v104, %v368
    %v370 = vpop.f32.mrf.mxu0
    %v371 = vadd.f32 %v104, %v370
    %372 = vmatmul.bf16.gmra.mxu0 %v198
    %v373 = vpop.f32.mrf.mxu0
    %v374 = vadd.f32 %v104, %v373
    %v375 = vpop.f32.mrf.mxu0
    %v376 = vadd.f32 %v104, %v375
    %377 = vdwg.mxu0
    %378 = vmatpush.bf16.msra.mxu0 0
    %379 = vmatpush.bf16.msra.mxu0 0
    %380 = vmatpush.bf16.msra.mxu0 0
    %381 = vmatpush.bf16.msra.mxu0 0
    %382 = vmatpush.bf16.msra.mxu0 0
    %383 = vmatpush.bf16.msra.mxu0 0
    %384 = vmatpush.bf16.msra.mxu0 %v141
    %385 = vmatpush.bf16.msra.mxu0 %v137
    %386 = vmatmul.bf16.gmra.mxu0 %v153
    %v387 = vpop.f32.mrf.mxu0
    %v388 = vadd.f32 %v105, %v387
    %v389 = vpop.f32.mrf.mxu0
    %v390 = vadd.f32 %v105, %v389
    %391 = vmatmul.bf16.gmra.mxu0 %v156
    %v392 = vpop.f32.mrf.mxu0
    %v393 = vadd.f32 %v105, %v392
    %v394 = vpop.f32.mrf.mxu0
    %v395 = vadd.f32 %v105, %v394
    %396 = vmatmul.bf16.gmra.mxu0 %v159
    %v397 = vpop.f32.mrf.mxu0
    %v398 = vadd.f32 %v105, %v397
    %v399 = vpop.f32.mrf.mxu0
    %v400 = vadd.f32 %v105, %v399
    %401 = vmatmul.bf16.gmra.mxu0 %v162
    %v402 = vpop.f32.mrf.mxu0
    %v403 = vadd.f32 %v105, %v402
    %v404 = vpop.f32.mrf.mxu0
    %v405 = vadd.f32 %v105, %v404
    %406 = vmatmul.bf16.gmra.mxu0 %v165
    %v407 = vpop.f32.mrf.mxu0
    %v408 = vadd.f32 %v105, %v407
    %v409 = vpop.f32.mrf.mxu0
    %v410 = vadd.f32 %v105, %v409
    %411 = vmatmul.bf16.gmra.mxu0 %v168
    %v412 = vpop.f32.mrf.mxu0
    %v413 = vadd.f32 %v105, %v412
    %v414 = vpop.f32.mrf.mxu0
    %v415 = vadd.f32 %v105, %v414
    %416 = vmatmul.bf16.gmra.mxu0 %v171
    %v417 = vpop.f32.mrf.mxu0
    %v418 = vadd.f32 %v105, %v417
    %v419 = vpop.f32.mrf.mxu0
    %v420 = vadd.f32 %v105, %v419
    %421 = vmatmul.bf16.gmra.mxu0 %v174
    %v422 = vpop.f32.mrf.mxu0
    %v423 = vadd.f32 %v105, %v422
    %v424 = vpop.f32.mrf.mxu0
    %v425 = vadd.f32 %v105, %v424
    %426 = vmatmul.bf16.gmra.mxu0 %v177
    %v427 = vpop.f32.mrf.mxu0
    %v428 = vadd.f32 %v105, %v427
    %v429 = vpop.f32.mrf.mxu0
    %v430 = vadd.f32 %v105, %v429
    %431 = vmatmul.bf16.gmra.mxu0 %v180
    %v432 = vpop.f32.mrf.mxu0
    %v433 = vadd.f32 %v105, %v432
    %v434 = vpop.f32.mrf.mxu0
    %v435 = vadd.f32 %v105, %v434
    %436 = vmatmul.bf16.gmra.mxu0 %v183
    %v437 = vpop.f32.mrf.mxu0
    %v438 = vadd.f32 %v105, %v437
    %v439 = vpop.f32.mrf.mxu0
    %v440 = vadd.f32 %v105, %v439
    %441 = vmatmul.bf16.gmra.mxu0 %v186
    %v442 = vpop.f32.mrf.mxu0
    %v443 = vadd.f32 %v105, %v442
    %v444 = vpop.f32.mrf.mxu0
    %v445 = vadd.f32 %v105, %v444
    %446 = vmatmul.bf16.gmra.mxu0 %v189
    %v447 = vpop.f32.mrf.mxu0
    %v448 = vadd.f32 %v105, %v447
    %v449 = vpop.f32.mrf.mxu0
    %v450 = vadd.f32 %v105, %v449
    %451 = vmatmul.bf16.gmra.mxu0 %v192
    %v452 = vpop.f32.mrf.mxu0
    %v453 = vadd.f32 %v105, %v452
    %v454 = vpop.f32.mrf.mxu0
    %v455 = vadd.f32 %v105, %v454
    %456 = vmatmul.bf16.gmra.mxu0 %v195
    %v457 = vpop.f32.mrf.mxu0
    %v458 = vadd.f32 %v105, %v457
    %v459 = vpop.f32.mrf.mxu0
    %v460 = vadd.f32 %v105, %v459
    %461 = vmatmul.bf16.gmra.mxu0 %v198
    %v462 = vpop.f32.mrf.mxu0
    %v463 = vadd.f32 %v105, %v462
    %v464 = vpop.f32.mrf.mxu0
    %v465 = vadd.f32 %v105, %v464
    %466 = vdwg.mxu0
    %467 = vmatpush.bf16.msra.mxu0 0
    %468 = vmatpush.bf16.msra.mxu0 0
    %469 = vmatpush.bf16.msra.mxu0 0
    %470 = vmatpush.bf16.msra.mxu0 0
    %471 = vmatpush.bf16.msra.mxu0 0
    %472 = vmatpush.bf16.msra.mxu0 0
    %473 = vmatpush.bf16.msra.mxu0 %v142
    %474 = vmatpush.bf16.msra.mxu0 %v138
    %475 = vmatmul.bf16.gmra.mxu0 %v153
    %v476 = vpop.f32.mrf.mxu0
    %v477 = vadd.f32 %v106, %v476
    %v478 = vpop.f32.mrf.mxu0
    %v479 = vadd.f32 %v106, %v478
    %480 = vmatmul.bf16.gmra.mxu0 %v156
    %v481 = vpop.f32.mrf.mxu0
    %v482 = vadd.f32 %v106, %v481
    %v483 = vpop.f32.mrf.mxu0
    %v484 = vadd.f32 %v106, %v483
    %485 = vmatmul.bf16.gmra.mxu0 %v159
    %v486 = vpop.f32.mrf.mxu0
    %v487 = vadd.f32 %v106, %v486
    %v488 = vpop.f32.mrf.mxu0
    %v489 = vadd.f32 %v106, %v488
    %490 = vmatmul.bf16.gmra.mxu0 %v162
    %v491 = vpop.f32.mrf.mxu0
    %v492 = vadd.f32 %v106, %v491
    %v493 = vpop.f32.mrf.mxu0
    %v494 = vadd.f32 %v106, %v493
    %495 = vmatmul.bf16.gmra.mxu0 %v165
    %v496 = vpop.f32.mrf.mxu0
    %v497 = vadd.f32 %v106, %v496
    %v498 = vpop.f32.mrf.mxu0
    %v499 = vadd.f32 %v106, %v498
    %500 = vmatmul.bf16.gmra.mxu0 %v168
    %v501 = vpop.f32.mrf.mxu0
    %v502 = vadd.f32 %v106, %v501
    %v503 = vpop.f32.mrf.mxu0
    %v504 = vadd.f32 %v106, %v503
    %505 = vmatmul.bf16.gmra.mxu0 %v171
    %v506 = vpop.f32.mrf.mxu0
    %v507 = vadd.f32 %v106, %v506
    %v508 = vpop.f32.mrf.mxu0
    %v509 = vadd.f32 %v106, %v508
    %510 = vmatmul.bf16.gmra.mxu0 %v174
    %v511 = vpop.f32.mrf.mxu0
    %v512 = vadd.f32 %v106, %v511
    %v513 = vpop.f32.mrf.mxu0
    %v514 = vadd.f32 %v106, %v513
    %515 = vmatmul.bf16.gmra.mxu0 %v177
    %v516 = vpop.f32.mrf.mxu0
    %v517 = vadd.f32 %v106, %v516
    %v518 = vpop.f32.mrf.mxu0
    %v519 = vadd.f32 %v106, %v518
    %520 = vmatmul.bf16.gmra.mxu0 %v180
    %v521 = vpop.f32.mrf.mxu0
    %v522 = vadd.f32 %v106, %v521
    %v523 = vpop.f32.mrf.mxu0
    %v524 = vadd.f32 %v106, %v523
    %525 = vmatmul.bf16.gmra.mxu0 %v183
    %v526 = vpop.f32.mrf.mxu0
    %v527 = vadd.f32 %v106, %v526
    %v528 = vpop.f32.mrf.mxu0
    %v529 = vadd.f32 %v106, %v528
    %530 = vmatmul.bf16.gmra.mxu0 %v186
    %v531 = vpop.f32.mrf.mxu0
    %v532 = vadd.f32 %v106, %v531
    %v533 = vpop.f32.mrf.mxu0
    %v534 = vadd.f32 %v106, %v533
    %535 = vmatmul.bf16.gmra.mxu0 %v189
    %v536 = vpop.f32.mrf.mxu0
    %v537 = vadd.f32 %v106, %v536
    %v538 = vpop.f32.mrf.mxu0
    %v539 = vadd.f32 %v106, %v538
    %540 = vmatmul.bf16.gmra.mxu0 %v192
    %v541 = vpop.f32.mrf.mxu0
    %v542 = vadd.f32 %v106, %v541
    %v543 = vpop.f32.mrf.mxu0
    %v544 = vadd.f32 %v106, %v543
    %545 = vmatmul.bf16.gmra.mxu0 %v195
    %v546 = vpop.f32.mrf.mxu0
    %v547 = vadd.f32 %v106, %v546
    %v548 = vpop.f32.mrf.mxu0
    %v549 = vadd.f32 %v106, %v548
    %550 = vmatmul.bf16.gmra.mxu0 %v198
    %v551 = vpop.f32.mrf.mxu0
    %v552 = vadd.f32 %v106, %v551
    %v553 = vpop.f32.mrf.mxu0
    %v554 = vadd.f32 %v106, %v553
    %555 = vdwg.mxu0
    %v556 = vmax.f32 %v210, 0.0
    %v557 = vmax.f32 %v299, 0.0
    %v558 = vmax.f32 %v388, 0.0
    %v559 = vmax.f32 %v477, 0.0
    %v560 = vmax.f32 %v212, 0.0
    %v561 = vmax.f32 %v301, 0.0
    %v562 = vmax.f32 %v390, 0.0
    %v563 = vmax.f32 %v479, 0.0
    %v564 = vmax.f32 %v215, 0.0
    %v565 = vmax.f32 %v304, 0.0
    %v566 = vmax.f32 %v393, 0.0
    %v567 = vmax.f32 %v482, 0.0
    %v568 = vmax.f32 %v217, 0.0
    %v569 = vmax.f32 %v306, 0.0
    %v570 = vmax.f32 %v395, 0.0
    %v571 = vmax.f32 %v484, 0.0
    %v572 = vmax.f32 %v220, 0.0
    %v573 = vmax.f32 %v309, 0.0
    %v574 = vmax.f32 %v398, 0.0
    %v575 = vmax.f32 %v487, 0.0
    %v576 = vmax.f32 %v222, 0.0
    %v577 = vmax.f32 %v311, 0.0
    %v578 = vmax.f32 %v400, 0.0
    %v579 = vmax.f32 %v489, 0.0
    %v580 = vmax.f32 %v225, 0.0
    %v581 = vmax.f32 %v314, 0.0
    %v582 = vmax.f32 %v403, 0.0
    %v583 = vmax.f32 %v492, 0.0
    %v584 = vmax.f32 %v227, 0.0
    %v585 = vmax.f32 %v316, 0.0
    %v586 = vmax.f32 %v405, 0.0
    %v587 = vmax.f32 %v494, 0.0
    %v588 = vmax.f32 %v230, 0.0
    %v589 = vmax.f32 %v319, 0.0
    %v590 = vmax.f32 %v408, 0.0
    %v591 = vmax.f32 %v497, 0.0
    %v592 = vmax.f32 %v232, 0.0
    %v593 = vmax.f32 %v321, 0.0
    %v594 = vmax.f32 %v410, 0.0
    %v595 = vmax.f32 %v499, 0.0
    %v596 = vmax.f32 %v235, 0.0
    %v597 = vmax.f32 %v324, 0.0
    %v598 = vmax.f32 %v413, 0.0
    %v599 = vmax.f32 %v502, 0.0
    %v600 = vmax.f32 %v237, 0.0
    %v601 = vmax.f32 %v326, 0.0
    %v602 = vmax.f32 %v415, 0.0
    %v603 = vmax.f32 %v504, 0.0
    %v604 = vmax.f32 %v240, 0.0
    %v605 = vmax.f32 %v329, 0.0
    %v606 = vmax.f32 %v418, 0.0
    %v607 = vmax.f32 %v507, 0.0
    %v608 = vmax.f32 %v242, 0.0
    %v609 = vmax.f32 %v331, 0.0
    %v610 = vmax.f32 %v420, 0.0
    %v611 = vmax.f32 %v509, 0.0
    %v612 = vmax.f32 %v245, 0.0
    %v613 = vmax.f32 %v334, 0.0
    %v614 = vmax.f32 %v423, 0.0
    %v615 = vmax.f32 %v512, 0.0
    %v616 = vmax.f32 %v247, 0.0
    %v617 = vmax.f32 %v336, 0.0
    %v618 = vmax.f32 %v425, 0.0
    %v619 = vmax.f32 %v514, 0.0
    %v620 = vmax.f32 %v250, 0.0
    %v621 = vmax.f32 %v339, 0.0
    %v622 = vmax.f32 %v428, 0.0
    %v623 = vmax.f32 %v517, 0.0
    %v624 = vmax.f32 %v252, 0.0
    %v625 = vmax.f32 %v341, 0.0
    %v626 = vmax.f32 %v430, 0.0
    %v627 = vmax.f32 %v519, 0.0
    %v628 = vmax.f32 %v255, 0.0
    %v629 = vmax.f32 %v344, 0.0
    %v630 = vmax.f32 %v433, 0.0
    %v631 = vmax.f32 %v522, 0.0
    %v632 = vmax.f32 %v257, 0.0
    %v633 = vmax.f32 %v346, 0.0
    %v634 = vmax.f32 %v435, 0.0
    %v635 = vmax.f32 %v524, 0.0
    %v636 = vmax.f32 %v260, 0.0
    %v637 = vmax.f32 %v349, 0.0
    %v638 = vmax.f32 %v438, 0.0
    %v639 = vmax.f32 %v527, 0.0
    %v640 = vmax.f32 %v262, 0.0
    %v641 = vmax.f32 %v351, 0.0
    %v642 = vmax.f32 %v440, 0.0
    %v643 = vmax.f32 %v529, 0.0
    %v644 = vmax.f32 %v265, 0.0
    %v645 = vmax.f32 %v354, 0.0
    %v646 = vmax.f32 %v443, 0.0
    %v647 = vmax.f32 %v532, 0.0
    %v648 = vmax.f32 %v267, 0.0
    %v649 = vmax.f32 %v356, 0.0
    %v650 = vmax.f32 %v445, 0.0
    %v651 = vmax.f32 %v534, 0.0
    %v652 = vmax.f32 %v270, 0.0
    %v653 = vmax.f32 %v359, 0.0
    %v654 = vmax.f32 %v448, 0.0
    %v655 = vmax.f32 %v537, 0.0
    %v656 = vmax.f32 %v272, 0.0
    %v657 = vmax.f32 %v361, 0.0
    %v658 = vmax.f32 %v450, 0.0
    %v659 = vmax.f32 %v539, 0.0
    %v660 = vmax.f32 %v275, 0.0
    %v661 = vmax.f32 %v364, 0.0
    %v662 = vmax.f32 %v453, 0.0
    %v663 = vmax.f32 %v542, 0.0
    %v664 = vmax.f32 %v277, 0.0
    %v665 = vmax.f32 %v366, 0.0
    %v666 = vmax.f32 %v455, 0.0
    %v667 = vmax.f32 %v544, 0.0
    %v668 = vmax.f32 %v280, 0.0
    %v669 = vmax.f32 %v369, 0.0
    %v670 = vmax.f32 %v458, 0.0
    %v671 = vmax.f32 %v547, 0.0
    %v672 = vmax.f32 %v282, 0.0
    %v673 = vmax.f32 %v371, 0.0
    %v674 = vmax.f32 %v460, 0.0
    %v675 = vmax.f32 %v549, 0.0
    %v676 = vmax.f32 %v285, 0.0
    %v677 = vmax.f32 %v374, 0.0
    %v678 = vmax.f32 %v463, 0.0
    %v679 = vmax.f32 %v552, 0.0
    %v680 = vmax.f32 %v287, 0.0
    %v681 = vmax.f32 %v376, 0.0
    %v682 = vmax.f32 %v465, 0.0
    %v683 = vmax.f32 %v554, 0.0
    %v684 = vpack.c.bf16 %v560, %v556
    %v685 = vpack.c.bf16 %v561, %v557
    %v686 = vpack.c.bf16 %v562, %v558
    %v687 = vpack.c.bf16 %v563, %v559
    %v688 = vpack.c.bf16 %v568, %v564
    %v689 = vpack.c.bf16 %v569, %v565
    %v690 = vpack.c.bf16 %v570, %v566
    %v691 = vpack.c.bf16 %v571, %v567
    %v692 = vpack.c.bf16 %v576, %v572
    %v693 = vpack.c.bf16 %v577, %v573
    %v694 = vpack.c.bf16 %v578, %v574
    %v695 = vpack.c.bf16 %v579, %v575
    %v696 = vpack.c.bf16 %v584, %v580
    %v697 = vpack.c.bf16 %v585, %v581
    %v698 = vpack.c.bf16 %v586, %v582
    %v699 = vpack.c.bf16 %v587, %v583
    %v700 = vpack.c.bf16 %v592, %v588
    %v701 = vpack.c.bf16 %v593, %v589
    %v702 = vpack.c.bf16 %v594, %v590
    %v703 = vpack.c.bf16 %v595, %v591
    %v704 = vpack.c.bf16 %v600, %v596
    %v705 = vpack.c.bf16 %v601, %v597
    %v706 = vpack.c.bf16 %v602, %v598
    %v707 = vpack.c.bf16 %v603, %v599
    %v708 = vpack.c.bf16 %v608, %v604
    %v709 = vpack.c.bf16 %v609, %v605
    %v710 = vpack.c.bf16 %v610, %v606
    %v711 = vpack.c.bf16 %v611, %v607
    %v712 = vpack.c.bf16 %v616, %v612
    %v713 = vpack.c.bf16 %v617, %v613
    %v714 = vpack.c.bf16 %v618, %v614
    %v715 = vpack.c.bf16 %v619, %v615
    %v716 = vpack.c.bf16 %v624, %v620
    %v717 = vpack.c.bf16 %v625, %v621
    %v718 = vpack.c.bf16 %v626, %v622
    %v719 = vpack.c.bf16 %v627, %v623
    %v720 = vpack.c.bf16 %v632, %v628
    %v721 = vpack.c.bf16 %v633, %v629
    %v722 = vpack.c.bf16 %v634, %v630
    %v723 = vpack.c.bf16 %v635, %v631
    %v724 = vpack.c.bf16 %v640, %v636
    %v725 = vpack.c.bf16 %v641, %v637
    %v726 = vpack.c.bf16 %v642, %v638
    %v727 = vpack.c.bf16 %v643, %v639
    %v728 = vpack.c.bf16 %v648, %v644
    %v729 = vpack.c.bf16 %v649, %v645
    %v730 = vpack.c.bf16 %v650, %v646
    %v731 = vpack.c.bf16 %v651, %v647
    %v732 = vpack.c.bf16 %v656, %v652
    %v733 = vpack.c.bf16 %v657, %v653
    %v734 = vpack.c.bf16 %v658, %v654
    %v735 = vpack.c.bf16 %v659, %v655
    %v736 = vpack.c.bf16 %v664, %v660
    %v737 = vpack.c.bf16 %v665, %v661
    %v738 = vpack.c.bf16 %v666, %v662
    %v739 = vpack.c.bf16 %v667, %v663
    %v740 = vpack.c.bf16 %v672, %v668
    %v741 = vpack.c.bf16 %v673, %v669
    %v742 = vpack.c.bf16 %v674, %v670
    %v743 = vpack.c.bf16 %v675, %v671
    %v744 = vpack.c.bf16 %v680, %v676
    %v745 = vpack.c.bf16 %v681, %v677
    %v746 = vpack.c.bf16 %v682, %v678
    %v747 = vpack.c.bf16 %v683, %v679
    %v748 = vld [vmem:[#allocation3] sm:$0xff]
    %v749 = vld [vmem:[#allocation3 + $0x8] sm:$0xff]
    %v750 = vld [vmem:[#allocation3 + $0x10] sm:$0xff]
    %v751 = vld [vmem:[#allocation3 + $0x18] sm:$0xff]
    %v752 = vld [vmem:[#allocation3 + $0x20] sm:$0xff]
    %v753 = vld [vmem:[#allocation3 + $0x28] sm:$0xff]
    %v754 = vld [vmem:[#allocation3 + $0x30] sm:$0xff]
    %v755 = vld [vmem:[#allocation3 + $0x38] sm:$0xff]
    %v756 = vld [vmem:[#allocation3 + $0x40] sm:$0xff]
    %v757 = vld [vmem:[#allocation3 + $0x48] sm:$0xff]
    %v758 = vld [vmem:[#allocation3 + $0x50] sm:$0xff]
    %v759 = vld [vmem:[#allocation3 + $0x58] sm:$0xff]
    %v760 = vld [vmem:[#allocation3 + $0x60] sm:$0xff]
    %v761 = vld [vmem:[#allocation3 + $0x68] sm:$0xff]
    %v762 = vld [vmem:[#allocation3 + $0x70] sm:$0xff]
    %v763 = vld [vmem:[#allocation3 + $0x78] sm:$0xff]
    %v764 = vld [vmem:[#allocation3 + $0x80] sm:$0xff]
    %v765 = vld [vmem:[#allocation3 + $0x88] sm:$0xff]
    %v766 = vld [vmem:[#allocation3 + $0x90] sm:$0xff]
    %v767 = vld [vmem:[#allocation3 + $0x98] sm:$0xff]
    %v768 = vld [vmem:[#allocation3 + $0xa0] sm:$0xff]
    %v769 = vld [vmem:[#allocation3 + $0xa8] sm:$0xff]
    %v770 = vld [vmem:[#allocation3 + $0xb0] sm:$0xff]
    %v771 = vld [vmem:[#allocation3 + $0xb8] sm:$0xff]
    %v772 = vld [vmem:[#allocation3 + $0xc0] sm:$0xff]
    %v773 = vld [vmem:[#allocation3 + $0xc8] sm:$0xff]
    %v774 = vld [vmem:[#allocation3 + $0xd0] sm:$0xff]
    %v775 = vld [vmem:[#allocation3 + $0xd8] sm:$0xff]
    %v776 = vld [vmem:[#allocation3 + $0xe0] sm:$0xff]
    %v777 = vld [vmem:[#allocation3 + $0xe8] sm:$0xff]
    %v778 = vld [vmem:[#allocation3 + $0xf0] sm:$0xff]
    %v779 = vld [vmem:[#allocation3 + $0xf8] sm:$0xff]
    %v780 = vld [vmem:[#allocation3 + $0x100] sm:$0xff]
    %v781 = vld [vmem:[#allocation3 + $0x108] sm:$0xff]
    %v782 = vld [vmem:[#allocation3 + $0x110] sm:$0xff]
    %v783 = vld [vmem:[#allocation3 + $0x118] sm:$0xff]
    %v784 = vld [vmem:[#allocation3 + $0x120] sm:$0xff]
    %v785 = vld [vmem:[#allocation3 + $0x128] sm:$0xff]
    %v786 = vld [vmem:[#allocation3 + $0x130] sm:$0xff]
    %v787 = vld [vmem:[#allocation3 + $0x138] sm:$0xff]
    %v788 = vld [vmem:[#allocation3 + $0x140] sm:$0xff]
    %v789 = vld [vmem:[#allocation3 + $0x148] sm:$0xff]
    %v790 = vld [vmem:[#allocation3 + $0x150] sm:$0xff]
    %v791 = vld [vmem:[#allocation3 + $0x158] sm:$0xff]
    %v792 = vld [vmem:[#allocation3 + $0x160] sm:$0xff]
    %v793 = vld [vmem:[#allocation3 + $0x168] sm:$0xff]
    %v794 = vld [vmem:[#allocation3 + $0x170] sm:$0xff]
    %v795 = vld [vmem:[#allocation3 + $0x178] sm:$0xff]
    %v796 = vld [vmem:[#allocation3 + $0x180] sm:$0xff]
    %v797 = vld [vmem:[#allocation3 + $0x188] sm:$0xff]
    %v798 = vld [vmem:[#allocation3 + $0x190] sm:$0xff]
    %v799 = vld [vmem:[#allocation3 + $0x198] sm:$0xff]
    %v800 = vld [vmem:[#allocation3 + $0x1a0] sm:$0xff]
    %v801 = vld [vmem:[#allocation3 + $0x1a8] sm:$0xff]
    %v802 = vld [vmem:[#allocation3 + $0x1b0] sm:$0xff]
    %v803 = vld [vmem:[#allocation3 + $0x1b8] sm:$0xff]
    %v804 = vld [vmem:[#allocation3 + $0x1c0] sm:$0xff]
    %v805 = vld [vmem:[#allocation3 + $0x1c8] sm:$0xff]
    %v806 = vld [vmem:[#allocation3 + $0x1d0] sm:$0xff]
    %v807 = vld [vmem:[#allocation3 + $0x1d8] sm:$0xff]
    %v808 = vld [vmem:[#allocation3 + $0x1e0] sm:$0xff]
    %v809 = vld [vmem:[#allocation3 + $0x1e8] sm:$0xff]
    %v810 = vld [vmem:[#allocation3 + $0x1f0] sm:$0xff]
    %v811 = vld [vmem:[#allocation3 + $0x1f8] sm:$0xff]
    %v812 = vld [vmem:[%s4] sm:$0x3]
    %v814 = vperm.slane %v812, 0
    %v815 = vperm.slane %v812, 1
    %v882 = vunpack.c.l.b16 %v748
    %v883 = vunpack.c.h.b16 %v748
    %v884 = vunpack.c.l.b16 %v749
    %v885 = vunpack.c.h.b16 %v749
    %v886 = vunpack.c.l.b16 %v750
    %v887 = vunpack.c.h.b16 %v750
    %v888 = vunpack.c.l.b16 %v751
    %v889 = vunpack.c.h.b16 %v751
    %v890 = vunpack.c.l.b16 %v752
    %v891 = vunpack.c.h.b16 %v752
    %v892 = vunpack.c.l.b16 %v753
    %v893 = vunpack.c.h.b16 %v753
    %v894 = vunpack.c.l.b16 %v754
    %v895 = vunpack.c.h.b16 %v754
    %v896 = vunpack.c.l.b16 %v755
    %v897 = vunpack.c.h.b16 %v755
    %v898 = vunpack.c.l.b16 %v756
    %v899 = vunpack.c.h.b16 %v756
    %v900 = vunpack.c.l.b16 %v757
    %v901 = vunpack.c.h.b16 %v757
    %v902 = vunpack.c.l.b16 %v758
    %v903 = vunpack.c.h.b16 %v758
    %v904 = vunpack.c.l.b16 %v759
    %v905 = vunpack.c.h.b16 %v759
    %v906 = vunpack.c.l.b16 %v760
    %v907 = vunpack.c.h.b16 %v760
    %v908 = vunpack.c.l.b16 %v761
    %v909 = vunpack.c.h.b16 %v761
    %v910 = vunpack.c.l.b16 %v762
    %v911 = vunpack.c.h.b16 %v762
    %v912 = vunpack.c.l.b16 %v763
    %v913 = vunpack.c.h.b16 %v763
    %v914 = vunpack.c.l.b16 %v764
    %v915 = vunpack.c.h.b16 %v764
    %v916 = vunpack.c.l.b16 %v765
    %v917 = vunpack.c.h.b16 %v765
    %v918 = vunpack.c.l.b16 %v766
    %v919 = vunpack.c.h.b16 %v766
    %v920 = vunpack.c.l.b16 %v767
    %v921 = vunpack.c.h.b16 %v767
    %v922 = vunpack.c.l.b16 %v768
    %v923 = vunpack.c.h.b16 %v768
    %v924 = vunpack.c.l.b16 %v769
    %v925 = vunpack.c.h.b16 %v769
    %v926 = vunpack.c.l.b16 %v770
    %v927 = vunpack.c.h.b16 %v770
    %v928 = vunpack.c.l.b16 %v771
    %v929 = vunpack.c.h.b16 %v771
    %v930 = vunpack.c.l.b16 %v772
    %v931 = vunpack.c.h.b16 %v772
    %v932 = vunpack.c.l.b16 %v773
    %v933 = vunpack.c.h.b16 %v773
    %v934 = vunpack.c.l.b16 %v774
    %v935 = vunpack.c.h.b16 %v774
    %v936 = vunpack.c.l.b16 %v775
    %v937 = vunpack.c.h.b16 %v775
    %v938 = vunpack.c.l.b16 %v776
    %v939 = vunpack.c.h.b16 %v776
    %v940 = vunpack.c.l.b16 %v777
    %v941 = vunpack.c.h.b16 %v777
    %v942 = vunpack.c.l.b16 %v778
    %v943 = vunpack.c.h.b16 %v778
    %v944 = vunpack.c.l.b16 %v779
    %v945 = vunpack.c.h.b16 %v779
    %v946 = vunpack.c.l.b16 %v780
    %v947 = vunpack.c.h.b16 %v780
    %v948 = vunpack.c.l.b16 %v781
    %v949 = vunpack.c.h.b16 %v781
    %v950 = vunpack.c.l.b16 %v782
    %v951 = vunpack.c.h.b16 %v782
    %v952 = vunpack.c.l.b16 %v783
    %v953 = vunpack.c.h.b16 %v783
    %v954 = vunpack.c.l.b16 %v784
    %v955 = vunpack.c.h.b16 %v784
    %v956 = vunpack.c.l.b16 %v785
    %v957 = vunpack.c.h.b16 %v785
    %v958 = vunpack.c.l.b16 %v786
    %v959 = vunpack.c.h.b16 %v786
    %v960 = vunpack.c.l.b16 %v787
    %v961 = vunpack.c.h.b16 %v787
    %v962 = vunpack.c.l.b16 %v788
    %v963 = vunpack.c.h.b16 %v788
    %v964 = vunpack.c.l.b16 %v789
    %v965 = vunpack.c.h.b16 %v789
    %v966 = vunpack.c.l.b16 %v790
    %v967 = vunpack.c.h.b16 %v790
    %v968 = vunpack.c.l.b16 %v791
    %v969 = vunpack.c.h.b16 %v791
    %v970 = vunpack.c.l.b16 %v792
    %v971 = vunpack.c.h.b16 %v792
    %v972 = vunpack.c.l.b16 %v793
    %v973 = vunpack.c.h.b16 %v793
    %v974 = vunpack.c.l.b16 %v794
    %v975 = vunpack.c.h.b16 %v794
    %v976 = vunpack.c.l.b16 %v795
    %v977 = vunpack.c.h.b16 %v795
    %v978 = vunpack.c.l.b16 %v796
    %v979 = vunpack.c.h.b16 %v796
    %v980 = vunpack.c.l.b16 %v797
    %v981 = vunpack.c.h.b16 %v797
    %v982 = vunpack.c.l.b16 %v798
    %v983 = vunpack.c.h.b16 %v798
    %v984 = vunpack.c.l.b16 %v799
    %v985 = vunpack.c.h.b16 %v799
    %v986 = vunpack.c.l.b16 %v800
    %v987 = vunpack.c.h.b16 %v800
    %v988 = vunpack.c.l.b16 %v801
    %v989 = vunpack.c.h.b16 %v801
    %v990 = vunpack.c.l.b16 %v802
    %v991 = vunpack.c.h.b16 %v802
    %v992 = vunpack.c.l.b16 %v803
    %v993 = vunpack.c.h.b16 %v803
    %v994 = vunpack.c.l.b16 %v804
    %v995 = vunpack.c.h.b16 %v804
    %v996 = vunpack.c.l.b16 %v805
    %v997 = vunpack.c.h.b16 %v805
    %v998 = vunpack.c.l.b16 %v806
    %v999 = vunpack.c.h.b16 %v806
    %v1000 = vunpack.c.l.b16 %v807
    %v1001 = vunpack.c.h.b16 %v807
    %v1002 = vunpack.c.l.b16 %v808
    %v1003 = vunpack.c.h.b16 %v808
    %v1004 = vunpack.c.l.b16 %v809
    %v1005 = vunpack.c.h.b16 %v809
    %v1006 = vunpack.c.l.b16 %v810
    %v1007 = vunpack.c.h.b16 %v810
    %v1008 = vunpack.c.l.b16 %v811
    %v1009 = vunpack.c.h.b16 %v811
    %v1010 = vpack.c.b16 %v884, %v882
    %v1011 = vpack.c.b16 %v885, %v883
    %v1012 = vpack.c.b16 %v888, %v886
    %v1013 = vpack.c.b16 %v889, %v887
    %v1014 = vpack.c.b16 %v892, %v890
    %v1015 = vpack.c.b16 %v893, %v891
    %v1016 = vpack.c.b16 %v896, %v894
    %v1017 = vpack.c.b16 %v897, %v895
    %v1018 = vpack.c.b16 %v900, %v898
    %v1019 = vpack.c.b16 %v901, %v899
    %v1020 = vpack.c.b16 %v904, %v902
    %v1021 = vpack.c.b16 %v905, %v903
    %v1022 = vpack.c.b16 %v908, %v906
    %v1023 = vpack.c.b16 %v909, %v907
    %v1024 = vpack.c.b16 %v912, %v910
    %v1025 = vpack.c.b16 %v913, %v911
    %v1026 = vpack.c.b16 %v916, %v914
    %v1027 = vpack.c.b16 %v917, %v915
    %v1028 = vpack.c.b16 %v920, %v918
    %v1029 = vpack.c.b16 %v921, %v919
    %v1030 = vpack.c.b16 %v924, %v922
    %v1031 = vpack.c.b16 %v925, %v923
    %v1032 = vpack.c.b16 %v928, %v926
    %v1033 = vpack.c.b16 %v929, %v927
    %v1034 = vpack.c.b16 %v932, %v930
    %v1035 = vpack.c.b16 %v933, %v931
    %v1036 = vpack.c.b16 %v936, %v934
    %v1037 = vpack.c.b16 %v937, %v935
    %v1038 = vpack.c.b16 %v940, %v938
    %v1039 = vpack.c.b16 %v941, %v939
    %v1040 = vpack.c.b16 %v944, %v942
    %v1041 = vpack.c.b16 %v945, %v943
    %v1042 = vpack.c.b16 %v948, %v946
    %v1043 = vpack.c.b16 %v949, %v947
    %v1044 = vpack.c.b16 %v952, %v950
    %v1045 = vpack.c.b16 %v953, %v951
    %v1046 = vpack.c.b16 %v956, %v954
    %v1047 = vpack.c.b16 %v957, %v955
    %v1048 = vpack.c.b16 %v960, %v958
    %v1049 = vpack.c.b16 %v961, %v959
    %v1050 = vpack.c.b16 %v964, %v962
    %v1051 = vpack.c.b16 %v965, %v963
    %v1052 = vpack.c.b16 %v968, %v966
    %v1053 = vpack.c.b16 %v969, %v967
    %v1054 = vpack.c.b16 %v972, %v970
    %v1055 = vpack.c.b16 %v973, %v971
    %v1056 = vpack.c.b16 %v976, %v974
    %v1057 = vpack.c.b16 %v977, %v975
    %v1058 = vpack.c.b16 %v980, %v978
    %v1059 = vpack.c.b16 %v981, %v979
    %v1060 = vpack.c.b16 %v984, %v982
    %v1061 = vpack.c.b16 %v985, %v983
    %v1062 = vpack.c.b16 %v988, %v986
    %v1063 = vpack.c.b16 %v989, %v987
    %v1064 = vpack.c.b16 %v992, %v990
    %v1065 = vpack.c.b16 %v993, %v991
    %v1066 = vpack.c.b16 %v996, %v994
    %v1067 = vpack.c.b16 %v997, %v995
    %v1068 = vpack.c.b16 %v1000, %v998
    %v1069 = vpack.c.b16 %v1001, %v999
    %v1070 = vpack.c.b16 %v1004, %v1002
    %v1071 = vpack.c.b16 %v1005, %v1003
    %v1072 = vpack.c.b16 %v1008, %v1006
    %v1073 = vpack.c.b16 %v1009, %v1007
    %1138 = vmatpush.bf16.msra.mxu0 %v1024
    %1139 = vmatpush.bf16.msra.mxu0 %v1022
    %1140 = vmatpush.bf16.msra.mxu0 %v1020
    %1141 = vmatpush.bf16.msra.mxu0 %v1018
    %1142 = vmatpush.bf16.msra.mxu0 %v1016
    %1143 = vmatpush.bf16.msra.mxu0 %v1014
    %1144 = vmatpush.bf16.msra.mxu0 %v1012
    %1145 = vmatpush.bf16.msra.mxu0 %v1010
    %1146 = vmatmul.bf16.gmra.mxu0 %v684
    %v1147 = vpop.f32.mrf.mxu0
    %v1148 = vadd.f32 %v814, %v1147
    %v1149 = vpop.f32.mrf.mxu0
    %v1150 = vadd.f32 %v814, %v1149
    %1151 = vmatmul.bf16.gmra.mxu0 %v688
    %v1152 = vpop.f32.mrf.mxu0
    %v1153 = vadd.f32 %v814, %v1152
    %v1154 = vpop.f32.mrf.mxu0
    %v1155 = vadd.f32 %v814, %v1154
    %1156 = vmatmul.bf16.gmra.mxu0 %v692
    %v1157 = vpop.f32.mrf.mxu0
    %v1158 = vadd.f32 %v814, %v1157
    %v1159 = vpop.f32.mrf.mxu0
    %v1160 = vadd.f32 %v814, %v1159
    %1161 = vmatmul.bf16.gmra.mxu0 %v696
    %v1162 = vpop.f32.mrf.mxu0
    %v1163 = vadd.f32 %v814, %v1162
    %v1164 = vpop.f32.mrf.mxu0
    %v1165 = vadd.f32 %v814, %v1164
    %1166 = vmatmul.bf16.gmra.mxu0 %v700
    %v1167 = vpop.f32.mrf.mxu0
    %v1168 = vadd.f32 %v814, %v1167
    %v1169 = vpop.f32.mrf.mxu0
    %v1170 = vadd.f32 %v814, %v1169
    %1171 = vmatmul.bf16.gmra.mxu0 %v704
    %v1172 = vpop.f32.mrf.mxu0
    %v1173 = vadd.f32 %v814, %v1172
    %v1174 = vpop.f32.mrf.mxu0
    %v1175 = vadd.f32 %v814, %v1174
    %1176 = vmatmul.bf16.gmra.mxu0 %v708
    %v1177 = vpop.f32.mrf.mxu0
    %v1178 = vadd.f32 %v814, %v1177
    %v1179 = vpop.f32.mrf.mxu0
    %v1180 = vadd.f32 %v814, %v1179
    %1181 = vmatmul.bf16.gmra.mxu0 %v712
    %v1182 = vpop.f32.mrf.mxu0
    %v1183 = vadd.f32 %v814, %v1182
    %v1184 = vpop.f32.mrf.mxu0
    %v1185 = vadd.f32 %v814, %v1184
    %1186 = vmatmul.bf16.gmra.mxu0 %v716
    %v1187 = vpop.f32.mrf.mxu0
    %v1188 = vadd.f32 %v814, %v1187
    %v1189 = vpop.f32.mrf.mxu0
    %v1190 = vadd.f32 %v814, %v1189
    %1191 = vmatmul.bf16.gmra.mxu0 %v720
    %v1192 = vpop.f32.mrf.mxu0
    %v1193 = vadd.f32 %v814, %v1192
    %v1194 = vpop.f32.mrf.mxu0
    %v1195 = vadd.f32 %v814, %v1194
    %1196 = vmatmul.bf16.gmra.mxu0 %v724
    %v1197 = vpop.f32.mrf.mxu0
    %v1198 = vadd.f32 %v814, %v1197
    %v1199 = vpop.f32.mrf.mxu0
    %v1200 = vadd.f32 %v814, %v1199
    %1201 = vmatmul.bf16.gmra.mxu0 %v728
    %v1202 = vpop.f32.mrf.mxu0
    %v1203 = vadd.f32 %v814, %v1202
    %v1204 = vpop.f32.mrf.mxu0
    %v1205 = vadd.f32 %v814, %v1204
    %1206 = vmatmul.bf16.gmra.mxu0 %v732
    %v1207 = vpop.f32.mrf.mxu0
    %v1208 = vadd.f32 %v814, %v1207
    %v1209 = vpop.f32.mrf.mxu0
    %v1210 = vadd.f32 %v814, %v1209
    %1211 = vmatmul.bf16.gmra.mxu0 %v736
    %v1212 = vpop.f32.mrf.mxu0
    %v1213 = vadd.f32 %v814, %v1212
    %v1214 = vpop.f32.mrf.mxu0
    %v1215 = vadd.f32 %v814, %v1214
    %1216 = vmatmul.bf16.gmra.mxu0 %v740
    %v1217 = vpop.f32.mrf.mxu0
    %v1218 = vadd.f32 %v814, %v1217
    %v1219 = vpop.f32.mrf.mxu0
    %v1220 = vadd.f32 %v814, %v1219
    %1221 = vmatmul.bf16.gmra.mxu0 %v744
    %v1222 = vpop.f32.mrf.mxu0
    %v1223 = vadd.f32 %v814, %v1222
    %v1224 = vpop.f32.mrf.mxu0
    %v1225 = vadd.f32 %v814, %v1224
    %1226 = vdwg.mxu0
    %1227 = vmatpush.bf16.msra.mxu0 %v1040
    %1228 = vmatpush.bf16.msra.mxu0 %v1038
    %1229 = vmatpush.bf16.msra.mxu0 %v1036
    %1230 = vmatpush.bf16.msra.mxu0 %v1034
    %1231 = vmatpush.bf16.msra.mxu0 %v1032
    %1232 = vmatpush.bf16.msra.mxu0 %v1030
    %1233 = vmatpush.bf16.msra.mxu0 %v1028
    %1234 = vmatpush.bf16.msra.mxu0 %v1026
    %1235 = vmatmul.bf16.gmra.mxu0 %v685
    %v1236 = vpop.f32.mrf.mxu0
    %v1237 = vadd.f32 %v1148, %v1236
    %v1238 = vpop.f32.mrf.mxu0
    %v1239 = vadd.f32 %v1150, %v1238
    %1240 = vmatmul.bf16.gmra.mxu0 %v689
    %v1241 = vpop.f32.mrf.mxu0
    %v1242 = vadd.f32 %v1153, %v1241
    %v1243 = vpop.f32.mrf.mxu0
    %v1244 = vadd.f32 %v1155, %v1243
    %1245 = vmatmul.bf16.gmra.mxu0 %v693
    %v1246 = vpop.f32.mrf.mxu0
    %v1247 = vadd.f32 %v1158, %v1246
    %v1248 = vpop.f32.mrf.mxu0
    %v1249 = vadd.f32 %v1160, %v1248
    %1250 = vmatmul.bf16.gmra.mxu0 %v697
    %v1251 = vpop.f32.mrf.mxu0
    %v1252 = vadd.f32 %v1163, %v1251
    %v1253 = vpop.f32.mrf.mxu0
    %v1254 = vadd.f32 %v1165, %v1253
    %1255 = vmatmul.bf16.gmra.mxu0 %v701
    %v1256 = vpop.f32.mrf.mxu0
    %v1257 = vadd.f32 %v1168, %v1256
    %v1258 = vpop.f32.mrf.mxu0
    %v1259 = vadd.f32 %v1170, %v1258
    %1260 = vmatmul.bf16.gmra.mxu0 %v705
    %v1261 = vpop.f32.mrf.mxu0
    %v1262 = vadd.f32 %v1173, %v1261
    %v1263 = vpop.f32.mrf.mxu0
    %v1264 = vadd.f32 %v1175, %v1263
    %1265 = vmatmul.bf16.gmra.mxu0 %v709
    %v1266 = vpop.f32.mrf.mxu0
    %v1267 = vadd.f32 %v1178, %v1266
    %v1268 = vpop.f32.mrf.mxu0
    %v1269 = vadd.f32 %v1180, %v1268
    %1270 = vmatmul.bf16.gmra.mxu0 %v713
    %v1271 = vpop.f32.mrf.mxu0
    %v1272 = vadd.f32 %v1183, %v1271
    %v1273 = vpop.f32.mrf.mxu0
    %v1274 = vadd.f32 %v1185, %v1273
    %1275 = vmatmul.bf16.gmra.mxu0 %v717
    %v1276 = vpop.f32.mrf.mxu0
    %v1277 = vadd.f32 %v1188, %v1276
    %v1278 = vpop.f32.mrf.mxu0
    %v1279 = vadd.f32 %v1190, %v1278
    %1280 = vmatmul.bf16.gmra.mxu0 %v721
    %v1281 = vpop.f32.mrf.mxu0
    %v1282 = vadd.f32 %v1193, %v1281
    %v1283 = vpop.f32.mrf.mxu0
    %v1284 = vadd.f32 %v1195, %v1283
    %1285 = vmatmul.bf16.gmra.mxu0 %v725
    %v1286 = vpop.f32.mrf.mxu0
    %v1287 = vadd.f32 %v1198, %v1286
    %v1288 = vpop.f32.mrf.mxu0
    %v1289 = vadd.f32 %v1200, %v1288
    %1290 = vmatmul.bf16.gmra.mxu0 %v729
    %v1291 = vpop.f32.mrf.mxu0
    %v1292 = vadd.f32 %v1203, %v1291
    %v1293 = vpop.f32.mrf.mxu0
    %v1294 = vadd.f32 %v1205, %v1293
    %1295 = vmatmul.bf16.gmra.mxu0 %v733
    %v1296 = vpop.f32.mrf.mxu0
    %v1297 = vadd.f32 %v1208, %v1296
    %v1298 = vpop.f32.mrf.mxu0
    %v1299 = vadd.f32 %v1210, %v1298
    %1300 = vmatmul.bf16.gmra.mxu0 %v737
    %v1301 = vpop.f32.mrf.mxu0
    %v1302 = vadd.f32 %v1213, %v1301
    %v1303 = vpop.f32.mrf.mxu0
    %v1304 = vadd.f32 %v1215, %v1303
    %1305 = vmatmul.bf16.gmra.mxu0 %v741
    %v1306 = vpop.f32.mrf.mxu0
    %v1307 = vadd.f32 %v1218, %v1306
    %v1308 = vpop.f32.mrf.mxu0
    %v1309 = vadd.f32 %v1220, %v1308
    %1310 = vmatmul.bf16.gmra.mxu0 %v745
    %v1311 = vpop.f32.mrf.mxu0
    %v1312 = vadd.f32 %v1223, %v1311
    %v1313 = vpop.f32.mrf.mxu0
    %v1314 = vadd.f32 %v1225, %v1313
    %1315 = vdwg.mxu0
    %1316 = vmatpush.bf16.msra.mxu0 %v1056
    %1317 = vmatpush.bf16.msra.mxu0 %v1054
    %1318 = vmatpush.bf16.msra.mxu0 %v1052
    %1319 = vmatpush.bf16.msra.mxu0 %v1050
    %1320 = vmatpush.bf16.msra.mxu0 %v1048
    %1321 = vmatpush.bf16.msra.mxu0 %v1046
    %1322 = vmatpush.bf16.msra.mxu0 %v1044
    %1323 = vmatpush.bf16.msra.mxu0 %v1042
    %1324 = vmatmul.bf16.gmra.mxu0 %v686
    %v1325 = vpop.f32.mrf.mxu0
    %v1326 = vadd.f32 %v1237, %v1325
    %v1327 = vpop.f32.mrf.mxu0
    %v1328 = vadd.f32 %v1239, %v1327
    %1329 = vmatmul.bf16.gmra.mxu0 %v690
    %v1330 = vpop.f32.mrf.mxu0
    %v1331 = vadd.f32 %v1242, %v1330
    %v1332 = vpop.f32.mrf.mxu0
    %v1333 = vadd.f32 %v1244, %v1332
    %1334 = vmatmul.bf16.gmra.mxu0 %v694
    %v1335 = vpop.f32.mrf.mxu0
    %v1336 = vadd.f32 %v1247, %v1335
    %v1337 = vpop.f32.mrf.mxu0
    %v1338 = vadd.f32 %v1249, %v1337
    %1339 = vmatmul.bf16.gmra.mxu0 %v698
    %v1340 = vpop.f32.mrf.mxu0
    %v1341 = vadd.f32 %v1252, %v1340
    %v1342 = vpop.f32.mrf.mxu0
    %v1343 = vadd.f32 %v1254, %v1342
    %1344 = vmatmul.bf16.gmra.mxu0 %v702
    %v1345 = vpop.f32.mrf.mxu0
    %v1346 = vadd.f32 %v1257, %v1345
    %v1347 = vpop.f32.mrf.mxu0
    %v1348 = vadd.f32 %v1259, %v1347
    %1349 = vmatmul.bf16.gmra.mxu0 %v706
    %v1350 = vpop.f32.mrf.mxu0
    %v1351 = vadd.f32 %v1262, %v1350
    %v1352 = vpop.f32.mrf.mxu0
    %v1353 = vadd.f32 %v1264, %v1352
    %1354 = vmatmul.bf16.gmra.mxu0 %v710
    %v1355 = vpop.f32.mrf.mxu0
    %v1356 = vadd.f32 %v1267, %v1355
    %v1357 = vpop.f32.mrf.mxu0
    %v1358 = vadd.f32 %v1269, %v1357
    %1359 = vmatmul.bf16.gmra.mxu0 %v714
    %v1360 = vpop.f32.mrf.mxu0
    %v1361 = vadd.f32 %v1272, %v1360
    %v1362 = vpop.f32.mrf.mxu0
    %v1363 = vadd.f32 %v1274, %v1362
    %1364 = vmatmul.bf16.gmra.mxu0 %v718
    %v1365 = vpop.f32.mrf.mxu0
    %v1366 = vadd.f32 %v1277, %v1365
    %v1367 = vpop.f32.mrf.mxu0
    %v1368 = vadd.f32 %v1279, %v1367
    %1369 = vmatmul.bf16.gmra.mxu0 %v722
    %v1370 = vpop.f32.mrf.mxu0
    %v1371 = vadd.f32 %v1282, %v1370
    %v1372 = vpop.f32.mrf.mxu0
    %v1373 = vadd.f32 %v1284, %v1372
    %1374 = vmatmul.bf16.gmra.mxu0 %v726
    %v1375 = vpop.f32.mrf.mxu0
    %v1376 = vadd.f32 %v1287, %v1375
    %v1377 = vpop.f32.mrf.mxu0
    %v1378 = vadd.f32 %v1289, %v1377
    %1379 = vmatmul.bf16.gmra.mxu0 %v730
    %v1380 = vpop.f32.mrf.mxu0
    %v1381 = vadd.f32 %v1292, %v1380
    %v1382 = vpop.f32.mrf.mxu0
    %v1383 = vadd.f32 %v1294, %v1382
    %1384 = vmatmul.bf16.gmra.mxu0 %v734
    %v1385 = vpop.f32.mrf.mxu0
    %v1386 = vadd.f32 %v1297, %v1385
    %v1387 = vpop.f32.mrf.mxu0
    %v1388 = vadd.f32 %v1299, %v1387
    %1389 = vmatmul.bf16.gmra.mxu0 %v738
    %v1390 = vpop.f32.mrf.mxu0
    %v1391 = vadd.f32 %v1302, %v1390
    %v1392 = vpop.f32.mrf.mxu0
    %v1393 = vadd.f32 %v1304, %v1392
    %1394 = vmatmul.bf16.gmra.mxu0 %v742
    %v1395 = vpop.f32.mrf.mxu0
    %v1396 = vadd.f32 %v1307, %v1395
    %v1397 = vpop.f32.mrf.mxu0
    %v1398 = vadd.f32 %v1309, %v1397
    %1399 = vmatmul.bf16.gmra.mxu0 %v746
    %v1400 = vpop.f32.mrf.mxu0
    %v1401 = vadd.f32 %v1312, %v1400
    %v1402 = vpop.f32.mrf.mxu0
    %v1403 = vadd.f32 %v1314, %v1402
    %1404 = vdwg.mxu0
    %1405 = vmatpush.bf16.msra.mxu0 %v1072
    %1406 = vmatpush.bf16.msra.mxu0 %v1070
    %1407 = vmatpush.bf16.msra.mxu0 %v1068
    %1408 = vmatpush.bf16.msra.mxu0 %v1066
    %1409 = vmatpush.bf16.msra.mxu0 %v1064
    %1410 = vmatpush.bf16.msra.mxu0 %v1062
    %1411 = vmatpush.bf16.msra.mxu0 %v1060
    %1412 = vmatpush.bf16.msra.mxu0 %v1058
    %1413 = vmatmul.bf16.gmra.mxu0 %v687
    %v1414 = vpop.f32.mrf.mxu0
    %v1415 = vadd.f32 %v1326, %v1414
    %v1416 = vpop.f32.mrf.mxu0
    %v1417 = vadd.f32 %v1328, %v1416
    %1418 = vmatmul.bf16.gmra.mxu0 %v691
    %v1419 = vpop.f32.mrf.mxu0
    %v1420 = vadd.f32 %v1331, %v1419
    %v1421 = vpop.f32.mrf.mxu0
    %v1422 = vadd.f32 %v1333, %v1421
    %1423 = vmatmul.bf16.gmra.mxu0 %v695
    %v1424 = vpop.f32.mrf.mxu0
    %v1425 = vadd.f32 %v1336, %v1424
    %v1426 = vpop.f32.mrf.mxu0
    %v1427 = vadd.f32 %v1338, %v1426
    %1428 = vmatmul.bf16.gmra.mxu0 %v699
    %v1429 = vpop.f32.mrf.mxu0
    %v1430 = vadd.f32 %v1341, %v1429
    %v1431 = vpop.f32.mrf.mxu0
    %v1432 = vadd.f32 %v1343, %v1431
    %1433 = vmatmul.bf16.gmra.mxu0 %v703
    %v1434 = vpop.f32.mrf.mxu0
    %v1435 = vadd.f32 %v1346, %v1434
    %v1436 = vpop.f32.mrf.mxu0
    %v1437 = vadd.f32 %v1348, %v1436
    %1438 = vmatmul.bf16.gmra.mxu0 %v707
    %v1439 = vpop.f32.mrf.mxu0
    %v1440 = vadd.f32 %v1351, %v1439
    %v1441 = vpop.f32.mrf.mxu0
    %v1442 = vadd.f32 %v1353, %v1441
    %1443 = vmatmul.bf16.gmra.mxu0 %v711
    %v1444 = vpop.f32.mrf.mxu0
    %v1445 = vadd.f32 %v1356, %v1444
    %v1446 = vpop.f32.mrf.mxu0
    %v1447 = vadd.f32 %v1358, %v1446
    %1448 = vmatmul.bf16.gmra.mxu0 %v715
    %v1449 = vpop.f32.mrf.mxu0
    %v1450 = vadd.f32 %v1361, %v1449
    %v1451 = vpop.f32.mrf.mxu0
    %v1452 = vadd.f32 %v1363, %v1451
    %1453 = vmatmul.bf16.gmra.mxu0 %v719
    %v1454 = vpop.f32.mrf.mxu0
    %v1455 = vadd.f32 %v1366, %v1454
    %v1456 = vpop.f32.mrf.mxu0
    %v1457 = vadd.f32 %v1368, %v1456
    %1458 = vmatmul.bf16.gmra.mxu0 %v723
    %v1459 = vpop.f32.mrf.mxu0
    %v1460 = vadd.f32 %v1371, %v1459
    %v1461 = vpop.f32.mrf.mxu0
    %v1462 = vadd.f32 %v1373, %v1461
    %1463 = vmatmul.bf16.gmra.mxu0 %v727
    %v1464 = vpop.f32.mrf.mxu0
    %v1465 = vadd.f32 %v1376, %v1464
    %v1466 = vpop.f32.mrf.mxu0
    %v1467 = vadd.f32 %v1378, %v1466
    %1468 = vmatmul.bf16.gmra.mxu0 %v731
    %v1469 = vpop.f32.mrf.mxu0
    %v1470 = vadd.f32 %v1381, %v1469
    %v1471 = vpop.f32.mrf.mxu0
    %v1472 = vadd.f32 %v1383, %v1471
    %1473 = vmatmul.bf16.gmra.mxu0 %v735
    %v1474 = vpop.f32.mrf.mxu0
    %v1475 = vadd.f32 %v1386, %v1474
    %v1476 = vpop.f32.mrf.mxu0
    %v1477 = vadd.f32 %v1388, %v1476
    %1478 = vmatmul.bf16.gmra.mxu0 %v739
    %v1479 = vpop.f32.mrf.mxu0
    %v1480 = vadd.f32 %v1391, %v1479
    %v1481 = vpop.f32.mrf.mxu0
    %v1482 = vadd.f32 %v1393, %v1481
    %1483 = vmatmul.bf16.gmra.mxu0 %v743
    %v1484 = vpop.f32.mrf.mxu0
    %v1485 = vadd.f32 %v1396, %v1484
    %v1486 = vpop.f32.mrf.mxu0
    %v1487 = vadd.f32 %v1398, %v1486
    %1488 = vmatmul.bf16.gmra.mxu0 %v747
    %v1489 = vpop.f32.mrf.mxu0
    %v1490 = vadd.f32 %v1401, %v1489
    %v1491 = vpop.f32.mrf.mxu0
    %v1492 = vadd.f32 %v1403, %v1491
    %1493 = vdwg.mxu0
    %1494 = vmatpush.bf16.msra.mxu0 %v1025
    %1495 = vmatpush.bf16.msra.mxu0 %v1023
    %1496 = vmatpush.bf16.msra.mxu0 %v1021
    %1497 = vmatpush.bf16.msra.mxu0 %v1019
    %1498 = vmatpush.bf16.msra.mxu0 %v1017
    %1499 = vmatpush.bf16.msra.mxu0 %v1015
    %1500 = vmatpush.bf16.msra.mxu0 %v1013
    %1501 = vmatpush.bf16.msra.mxu0 %v1011
    %1502 = vmatmul.bf16.gmra.mxu0 %v684
    %v1503 = vpop.f32.mrf.mxu0
    %v1504 = vadd.f32 %v815, %v1503
    %v1505 = vpop.f32.mrf.mxu0
    %v1506 = vadd.f32 %v815, %v1505
    %1507 = vmatmul.bf16.gmra.mxu0 %v688
    %v1508 = vpop.f32.mrf.mxu0
    %v1509 = vadd.f32 %v815, %v1508
    %v1510 = vpop.f32.mrf.mxu0
    %v1511 = vadd.f32 %v815, %v1510
    %1512 = vmatmul.bf16.gmra.mxu0 %v692
    %v1513 = vpop.f32.mrf.mxu0
    %v1514 = vadd.f32 %v815, %v1513
    %v1515 = vpop.f32.mrf.mxu0
    %v1516 = vadd.f32 %v815, %v1515
    %1517 = vmatmul.bf16.gmra.mxu0 %v696
    %v1518 = vpop.f32.mrf.mxu0
    %v1519 = vadd.f32 %v815, %v1518
    %v1520 = vpop.f32.mrf.mxu0
    %v1521 = vadd.f32 %v815, %v1520
    %1522 = vmatmul.bf16.gmra.mxu0 %v700
    %v1523 = vpop.f32.mrf.mxu0
    %v1524 = vadd.f32 %v815, %v1523
    %v1525 = vpop.f32.mrf.mxu0
    %v1526 = vadd.f32 %v815, %v1525
    %1527 = vmatmul.bf16.gmra.mxu0 %v704
    %v1528 = vpop.f32.mrf.mxu0
    %v1529 = vadd.f32 %v815, %v1528
    %v1530 = vpop.f32.mrf.mxu0
    %v1531 = vadd.f32 %v815, %v1530
    %1532 = vmatmul.bf16.gmra.mxu0 %v708
    %v1533 = vpop.f32.mrf.mxu0
    %v1534 = vadd.f32 %v815, %v1533
    %v1535 = vpop.f32.mrf.mxu0
    %v1536 = vadd.f32 %v815, %v1535
    %1537 = vmatmul.bf16.gmra.mxu0 %v712
    %v1538 = vpop.f32.mrf.mxu0
    %v1539 = vadd.f32 %v815, %v1538
    %v1540 = vpop.f32.mrf.mxu0
    %v1541 = vadd.f32 %v815, %v1540
    %1542 = vmatmul.bf16.gmra.mxu0 %v716
    %v1543 = vpop.f32.mrf.mxu0
    %v1544 = vadd.f32 %v815, %v1543
    %v1545 = vpop.f32.mrf.mxu0
    %v1546 = vadd.f32 %v815, %v1545
    %1547 = vmatmul.bf16.gmra.mxu0 %v720
    %v1548 = vpop.f32.mrf.mxu0
    %v1549 = vadd.f32 %v815, %v1548
    %v1550 = vpop.f32.mrf.mxu0
    %v1551 = vadd.f32 %v815, %v1550
    %1552 = vmatmul.bf16.gmra.mxu0 %v724
    %v1553 = vpop.f32.mrf.mxu0
    %v1554 = vadd.f32 %v815, %v1553
    %v1555 = vpop.f32.mrf.mxu0
    %v1556 = vadd.f32 %v815, %v1555
    %1557 = vmatmul.bf16.gmra.mxu0 %v728
    %v1558 = vpop.f32.mrf.mxu0
    %v1559 = vadd.f32 %v815, %v1558
    %v1560 = vpop.f32.mrf.mxu0
    %v1561 = vadd.f32 %v815, %v1560
    %1562 = vmatmul.bf16.gmra.mxu0 %v732
    %v1563 = vpop.f32.mrf.mxu0
    %v1564 = vadd.f32 %v815, %v1563
    %v1565 = vpop.f32.mrf.mxu0
    %v1566 = vadd.f32 %v815, %v1565
    %1567 = vmatmul.bf16.gmra.mxu0 %v736
    %v1568 = vpop.f32.mrf.mxu0
    %v1569 = vadd.f32 %v815, %v1568
    %v1570 = vpop.f32.mrf.mxu0
    %v1571 = vadd.f32 %v815, %v1570
    %1572 = vmatmul.bf16.gmra.mxu0 %v740
    %v1573 = vpop.f32.mrf.mxu0
    %v1574 = vadd.f32 %v815, %v1573
    %v1575 = vpop.f32.mrf.mxu0
    %v1576 = vadd.f32 %v815, %v1575
    %1577 = vmatmul.bf16.gmra.mxu0 %v744
    %v1578 = vpop.f32.mrf.mxu0
    %v1579 = vadd.f32 %v815, %v1578
    %v1580 = vpop.f32.mrf.mxu0
    %v1581 = vadd.f32 %v815, %v1580
    %1582 = vdwg.mxu0
    %1583 = vmatpush.bf16.msra.mxu0 %v1041
    %1584 = vmatpush.bf16.msra.mxu0 %v1039
    %1585 = vmatpush.bf16.msra.mxu0 %v1037
    %1586 = vmatpush.bf16.msra.mxu0 %v1035
    %1587 = vmatpush.bf16.msra.mxu0 %v1033
    %1588 = vmatpush.bf16.msra.mxu0 %v1031
    %1589 = vmatpush.bf16.msra.mxu0 %v1029
    %1590 = vmatpush.bf16.msra.mxu0 %v1027
    %1591 = vmatmul.bf16.gmra.mxu0 %v685
    %v1592 = vpop.f32.mrf.mxu0
    %v1593 = vadd.f32 %v1504, %v1592
    %v1594 = vpop.f32.mrf.mxu0
    %v1595 = vadd.f32 %v1506, %v1594
    %1596 = vmatmul.bf16.gmra.mxu0 %v689
    %v1597 = vpop.f32.mrf.mxu0
    %v1598 = vadd.f32 %v1509, %v1597
    %v1599 = vpop.f32.mrf.mxu0
    %v1600 = vadd.f32 %v1511, %v1599
    %1601 = vmatmul.bf16.gmra.mxu0 %v693
    %v1602 = vpop.f32.mrf.mxu0
    %v1603 = vadd.f32 %v1514, %v1602
    %v1604 = vpop.f32.mrf.mxu0
    %v1605 = vadd.f32 %v1516, %v1604
    %1606 = vmatmul.bf16.gmra.mxu0 %v697
    %v1607 = vpop.f32.mrf.mxu0
    %v1608 = vadd.f32 %v1519, %v1607
    %v1609 = vpop.f32.mrf.mxu0
    %v1610 = vadd.f32 %v1521, %v1609
    %1611 = vmatmul.bf16.gmra.mxu0 %v701
    %v1612 = vpop.f32.mrf.mxu0
    %v1613 = vadd.f32 %v1524, %v1612
    %v1614 = vpop.f32.mrf.mxu0
    %v1615 = vadd.f32 %v1526, %v1614
    %1616 = vmatmul.bf16.gmra.mxu0 %v705
    %v1617 = vpop.f32.mrf.mxu0
    %v1618 = vadd.f32 %v1529, %v1617
    %v1619 = vpop.f32.mrf.mxu0
    %v1620 = vadd.f32 %v1531, %v1619
    %1621 = vmatmul.bf16.gmra.mxu0 %v709
    %v1622 = vpop.f32.mrf.mxu0
    %v1623 = vadd.f32 %v1534, %v1622
    %v1624 = vpop.f32.mrf.mxu0
    %v1625 = vadd.f32 %v1536, %v1624
    %1626 = vmatmul.bf16.gmra.mxu0 %v713
    %v1627 = vpop.f32.mrf.mxu0
    %v1628 = vadd.f32 %v1539, %v1627
    %v1629 = vpop.f32.mrf.mxu0
    %v1630 = vadd.f32 %v1541, %v1629
    %1631 = vmatmul.bf16.gmra.mxu0 %v717
    %v1632 = vpop.f32.mrf.mxu0
    %v1633 = vadd.f32 %v1544, %v1632
    %v1634 = vpop.f32.mrf.mxu0
    %v1635 = vadd.f32 %v1546, %v1634
    %1636 = vmatmul.bf16.gmra.mxu0 %v721
    %v1637 = vpop.f32.mrf.mxu0
    %v1638 = vadd.f32 %v1549, %v1637
    %v1639 = vpop.f32.mrf.mxu0
    %v1640 = vadd.f32 %v1551, %v1639
    %1641 = vmatmul.bf16.gmra.mxu0 %v725
    %v1642 = vpop.f32.mrf.mxu0
    %v1643 = vadd.f32 %v1554, %v1642
    %v1644 = vpop.f32.mrf.mxu0
    %v1645 = vadd.f32 %v1556, %v1644
    %1646 = vmatmul.bf16.gmra.mxu0 %v729
    %v1647 = vpop.f32.mrf.mxu0
    %v1648 = vadd.f32 %v1559, %v1647
    %v1649 = vpop.f32.mrf.mxu0
    %v1650 = vadd.f32 %v1561, %v1649
    %1651 = vmatmul.bf16.gmra.mxu0 %v733
    %v1652 = vpop.f32.mrf.mxu0
    %v1653 = vadd.f32 %v1564, %v1652
    %v1654 = vpop.f32.mrf.mxu0
    %v1655 = vadd.f32 %v1566, %v1654
    %1656 = vmatmul.bf16.gmra.mxu0 %v737
    %v1657 = vpop.f32.mrf.mxu0
    %v1658 = vadd.f32 %v1569, %v1657
    %v1659 = vpop.f32.mrf.mxu0
    %v1660 = vadd.f32 %v1571, %v1659
    %1661 = vmatmul.bf16.gmra.mxu0 %v741
    %v1662 = vpop.f32.mrf.mxu0
    %v1663 = vadd.f32 %v1574, %v1662
    %v1664 = vpop.f32.mrf.mxu0
    %v1665 = vadd.f32 %v1576, %v1664
    %1666 = vmatmul.bf16.gmra.mxu0 %v745
    %v1667 = vpop.f32.mrf.mxu0
    %v1668 = vadd.f32 %v1579, %v1667
    %v1669 = vpop.f32.mrf.mxu0
    %v1670 = vadd.f32 %v1581, %v1669
    %1671 = vdwg.mxu0
    %1672 = vmatpush.bf16.msra.mxu0 %v1057
    %1673 = vmatpush.bf16.msra.mxu0 %v1055
    %1674 = vmatpush.bf16.msra.mxu0 %v1053
    %1675 = vmatpush.bf16.msra.mxu0 %v1051
    %1676 = vmatpush.bf16.msra.mxu0 %v1049
    %1677 = vmatpush.bf16.msra.mxu0 %v1047
    %1678 = vmatpush.bf16.msra.mxu0 %v1045
    %1679 = vmatpush.bf16.msra.mxu0 %v1043
    %1680 = vmatmul.bf16.gmra.mxu0 %v686
    %v1681 = vpop.f32.mrf.mxu0
    %v1682 = vadd.f32 %v1593, %v1681
    %v1683 = vpop.f32.mrf.mxu0
    %v1684 = vadd.f32 %v1595, %v1683
    %1685 = vmatmul.bf16.gmra.mxu0 %v690
    %v1686 = vpop.f32.mrf.mxu0
    %v1687 = vadd.f32 %v1598, %v1686
    %v1688 = vpop.f32.mrf.mxu0
    %v1689 = vadd.f32 %v1600, %v1688
    %1690 = vmatmul.bf16.gmra.mxu0 %v694
    %v1691 = vpop.f32.mrf.mxu0
    %v1692 = vadd.f32 %v1603, %v1691
    %v1693 = vpop.f32.mrf.mxu0
    %v1694 = vadd.f32 %v1605, %v1693
    %1695 = vmatmul.bf16.gmra.mxu0 %v698
    %v1696 = vpop.f32.mrf.mxu0
    %v1697 = vadd.f32 %v1608, %v1696
    %v1698 = vpop.f32.mrf.mxu0
    %v1699 = vadd.f32 %v1610, %v1698
    %1700 = vmatmul.bf16.gmra.mxu0 %v702
    %v1701 = vpop.f32.mrf.mxu0
    %v1702 = vadd.f32 %v1613, %v1701
    %v1703 = vpop.f32.mrf.mxu0
    %v1704 = vadd.f32 %v1615, %v1703
    %1705 = vmatmul.bf16.gmra.mxu0 %v706
    %v1706 = vpop.f32.mrf.mxu0
    %v1707 = vadd.f32 %v1618, %v1706
    %v1708 = vpop.f32.mrf.mxu0
    %v1709 = vadd.f32 %v1620, %v1708
    %1710 = vmatmul.bf16.gmra.mxu0 %v710
    %v1711 = vpop.f32.mrf.mxu0
    %v1712 = vadd.f32 %v1623, %v1711
    %v1713 = vpop.f32.mrf.mxu0
    %v1714 = vadd.f32 %v1625, %v1713
    %1715 = vmatmul.bf16.gmra.mxu0 %v714
    %v1716 = vpop.f32.mrf.mxu0
    %v1717 = vadd.f32 %v1628, %v1716
    %v1718 = vpop.f32.mrf.mxu0
    %v1719 = vadd.f32 %v1630, %v1718
    %1720 = vmatmul.bf16.gmra.mxu0 %v718
    %v1721 = vpop.f32.mrf.mxu0
    %v1722 = vadd.f32 %v1633, %v1721
    %v1723 = vpop.f32.mrf.mxu0
    %v1724 = vadd.f32 %v1635, %v1723
    %1725 = vmatmul.bf16.gmra.mxu0 %v722
    %v1726 = vpop.f32.mrf.mxu0
    %v1727 = vadd.f32 %v1638, %v1726
    %v1728 = vpop.f32.mrf.mxu0
    %v1729 = vadd.f32 %v1640, %v1728
    %1730 = vmatmul.bf16.gmra.mxu0 %v726
    %v1731 = vpop.f32.mrf.mxu0
    %v1732 = vadd.f32 %v1643, %v1731
    %v1733 = vpop.f32.mrf.mxu0
    %v1734 = vadd.f32 %v1645, %v1733
    %1735 = vmatmul.bf16.gmra.mxu0 %v730
    %v1736 = vpop.f32.mrf.mxu0
    %v1737 = vadd.f32 %v1648, %v1736
    %v1738 = vpop.f32.mrf.mxu0
    %v1739 = vadd.f32 %v1650, %v1738
    %1740 = vmatmul.bf16.gmra.mxu0 %v734
    %v1741 = vpop.f32.mrf.mxu0
    %v1742 = vadd.f32 %v1653, %v1741
    %v1743 = vpop.f32.mrf.mxu0
    %v1744 = vadd.f32 %v1655, %v1743
    %1745 = vmatmul.bf16.gmra.mxu0 %v738
    %v1746 = vpop.f32.mrf.mxu0
    %v1747 = vadd.f32 %v1658, %v1746
    %v1748 = vpop.f32.mrf.mxu0
    %v1749 = vadd.f32 %v1660, %v1748
    %1750 = vmatmul.bf16.gmra.mxu0 %v742
    %v1751 = vpop.f32.mrf.mxu0
    %v1752 = vadd.f32 %v1663, %v1751
    %v1753 = vpop.f32.mrf.mxu0
    %v1754 = vadd.f32 %v1665, %v1753
    %1755 = vmatmul.bf16.gmra.mxu0 %v746
    %v1756 = vpop.f32.mrf.mxu0
    %v1757 = vadd.f32 %v1668, %v1756
    %v1758 = vpop.f32.mrf.mxu0
    %v1759 = vadd.f32 %v1670, %v1758
    %1760 = vdwg.mxu0
    %1761 = vmatpush.bf16.msra.mxu0 %v1073
    %1762 = vmatpush.bf16.msra.mxu0 %v1071
    %1763 = vmatpush.bf16.msra.mxu0 %v1069
    %1764 = vmatpush.bf16.msra.mxu0 %v1067
    %1765 = vmatpush.bf16.msra.mxu0 %v1065
    %1766 = vmatpush.bf16.msra.mxu0 %v1063
    %1767 = vmatpush.bf16.msra.mxu0 %v1061
    %1768 = vmatpush.bf16.msra.mxu0 %v1059
    %1769 = vmatmul.bf16.gmra.mxu0 %v687
    %v1770 = vpop.f32.mrf.mxu0
    %v1771 = vadd.f32 %v1682, %v1770
    %v1772 = vpop.f32.mrf.mxu0
    %v1773 = vadd.f32 %v1684, %v1772
    %1774 = vmatmul.bf16.gmra.mxu0 %v691
    %v1775 = vpop.f32.mrf.mxu0
    %v1776 = vadd.f32 %v1687, %v1775
    %v1777 = vpop.f32.mrf.mxu0
    %v1778 = vadd.f32 %v1689, %v1777
    %1779 = vmatmul.bf16.gmra.mxu0 %v695
    %v1780 = vpop.f32.mrf.mxu0
    %v1781 = vadd.f32 %v1692, %v1780
    %v1782 = vpop.f32.mrf.mxu0
    %v1783 = vadd.f32 %v1694, %v1782
    %1784 = vmatmul.bf16.gmra.mxu0 %v699
    %v1785 = vpop.f32.mrf.mxu0
    %v1786 = vadd.f32 %v1697, %v1785
    %v1787 = vpop.f32.mrf.mxu0
    %v1788 = vadd.f32 %v1699, %v1787
    %1789 = vmatmul.bf16.gmra.mxu0 %v703
    %v1790 = vpop.f32.mrf.mxu0
    %v1791 = vadd.f32 %v1702, %v1790
    %v1792 = vpop.f32.mrf.mxu0
    %v1793 = vadd.f32 %v1704, %v1792
    %1794 = vmatmul.bf16.gmra.mxu0 %v707
    %v1795 = vpop.f32.mrf.mxu0
    %v1796 = vadd.f32 %v1707, %v1795
    %v1797 = vpop.f32.mrf.mxu0
    %v1798 = vadd.f32 %v1709, %v1797
    %1799 = vmatmul.bf16.gmra.mxu0 %v711
    %v1800 = vpop.f32.mrf.mxu0
    %v1801 = vadd.f32 %v1712, %v1800
    %v1802 = vpop.f32.mrf.mxu0
    %v1803 = vadd.f32 %v1714, %v1802
    %1804 = vmatmul.bf16.gmra.mxu0 %v715
    %v1805 = vpop.f32.mrf.mxu0
    %v1806 = vadd.f32 %v1717, %v1805
    %v1807 = vpop.f32.mrf.mxu0
    %v1808 = vadd.f32 %v1719, %v1807
    %1809 = vmatmul.bf16.gmra.mxu0 %v719
    %v1810 = vpop.f32.mrf.mxu0
    %v1811 = vadd.f32 %v1722, %v1810
    %v1812 = vpop.f32.mrf.mxu0
    %v1813 = vadd.f32 %v1724, %v1812
    %1814 = vmatmul.bf16.gmra.mxu0 %v723
    %v1815 = vpop.f32.mrf.mxu0
    %v1816 = vadd.f32 %v1727, %v1815
    %v1817 = vpop.f32.mrf.mxu0
    %v1818 = vadd.f32 %v1729, %v1817
    %1819 = vmatmul.bf16.gmra.mxu0 %v727
    %v1820 = vpop.f32.mrf.mxu0
    %v1821 = vadd.f32 %v1732, %v1820
    %v1822 = vpop.f32.mrf.mxu0
    %v1823 = vadd.f32 %v1734, %v1822
    %1824 = vmatmul.bf16.gmra.mxu0 %v731
    %v1825 = vpop.f32.mrf.mxu0
    %v1826 = vadd.f32 %v1737, %v1825
    %v1827 = vpop.f32.mrf.mxu0
    %v1828 = vadd.f32 %v1739, %v1827
    %1829 = vmatmul.bf16.gmra.mxu0 %v735
    %v1830 = vpop.f32.mrf.mxu0
    %v1831 = vadd.f32 %v1742, %v1830
    %v1832 = vpop.f32.mrf.mxu0
    %v1833 = vadd.f32 %v1744, %v1832
    %1834 = vmatmul.bf16.gmra.mxu0 %v739
    %v1835 = vpop.f32.mrf.mxu0
    %v1836 = vadd.f32 %v1747, %v1835
    %v1837 = vpop.f32.mrf.mxu0
    %v1838 = vadd.f32 %v1749, %v1837
    %1839 = vmatmul.bf16.gmra.mxu0 %v743
    %v1840 = vpop.f32.mrf.mxu0
    %v1841 = vadd.f32 %v1752, %v1840
    %v1842 = vpop.f32.mrf.mxu0
    %v1843 = vadd.f32 %v1754, %v1842
    %1844 = vmatmul.bf16.gmra.mxu0 %v747
    %v1845 = vpop.f32.mrf.mxu0
    %v1846 = vadd.f32 %v1757, %v1845
    %v1847 = vpop.f32.mrf.mxu0
    %v1848 = vadd.f32 %v1759, %v1847
    %1849 = vdwg.mxu0
    %v1850 = vmax.f32 %v1415, 0.0
    %v1851 = vmax.f32 %v1771, 0.0
    %v1852 = vmax.f32 %v1417, 0.0
    %v1853 = vmax.f32 %v1773, 0.0
    %v1854 = vmax.f32 %v1420, 0.0
    %v1855 = vmax.f32 %v1776, 0.0
    %v1856 = vmax.f32 %v1422, 0.0
    %v1857 = vmax.f32 %v1778, 0.0
    %v1858 = vmax.f32 %v1425, 0.0
    %v1859 = vmax.f32 %v1781, 0.0
    %v1860 = vmax.f32 %v1427, 0.0
    %v1861 = vmax.f32 %v1783, 0.0
    %v1862 = vmax.f32 %v1430, 0.0
    %v1863 = vmax.f32 %v1786, 0.0
    %v1864 = vmax.f32 %v1432, 0.0
    %v1865 = vmax.f32 %v1788, 0.0
    %v1866 = vmax.f32 %v1435, 0.0
    %v1867 = vmax.f32 %v1791, 0.0
    %v1868 = vmax.f32 %v1437, 0.0
    %v1869 = vmax.f32 %v1793, 0.0
    %v1870 = vmax.f32 %v1440, 0.0
    %v1871 = vmax.f32 %v1796, 0.0
    %v1872 = vmax.f32 %v1442, 0.0
    %v1873 = vmax.f32 %v1798, 0.0
    %v1874 = vmax.f32 %v1445, 0.0
    %v1875 = vmax.f32 %v1801, 0.0
    %v1876 = vmax.f32 %v1447, 0.0
    %v1877 = vmax.f32 %v1803, 0.0
    %v1878 = vmax.f32 %v1450, 0.0
    %v1879 = vmax.f32 %v1806, 0.0
    %v1880 = vmax.f32 %v1452, 0.0
    %v1881 = vmax.f32 %v1808, 0.0
    %v1882 = vmax.f32 %v1455, 0.0
    %v1883 = vmax.f32 %v1811, 0.0
    %v1884 = vmax.f32 %v1457, 0.0
    %v1885 = vmax.f32 %v1813, 0.0
    %v1886 = vmax.f32 %v1460, 0.0
    %v1887 = vmax.f32 %v1816, 0.0
    %v1888 = vmax.f32 %v1462, 0.0
    %v1889 = vmax.f32 %v1818, 0.0
    %v1890 = vmax.f32 %v1465, 0.0
    %v1891 = vmax.f32 %v1821, 0.0
    %v1892 = vmax.f32 %v1467, 0.0
    %v1893 = vmax.f32 %v1823, 0.0
    %v1894 = vmax.f32 %v1470, 0.0
    %v1895 = vmax.f32 %v1826, 0.0
    %v1896 = vmax.f32 %v1472, 0.0
    %v1897 = vmax.f32 %v1828, 0.0
    %v1898 = vmax.f32 %v1475, 0.0
    %v1899 = vmax.f32 %v1831, 0.0
    %v1900 = vmax.f32 %v1477, 0.0
    %v1901 = vmax.f32 %v1833, 0.0
    %v1902 = vmax.f32 %v1480, 0.0
    %v1903 = vmax.f32 %v1836, 0.0
    %v1904 = vmax.f32 %v1482, 0.0
    %v1905 = vmax.f32 %v1838, 0.0
    %v1906 = vmax.f32 %v1485, 0.0
    %v1907 = vmax.f32 %v1841, 0.0
    %v1908 = vmax.f32 %v1487, 0.0
    %v1909 = vmax.f32 %v1843, 0.0
    %v1910 = vmax.f32 %v1490, 0.0
    %v1911 = vmax.f32 %v1846, 0.0
    %v1912 = vmax.f32 %v1492, 0.0
    %v1913 = vmax.f32 %v1848, 0.0
    %v1914 = vld [vmem:[%s5] sm:$0x3]
    %v1916 = vperm.slane %v1914, 0
    %v1917 = vperm.slane %v1914, 1
    %v1920 = vmul.f32 %v1850, %v1916
    %v1921 = vmul.f32 %v1851, %v1917
    %v1922 = vmul.f32 %v1852, %v1916
    %v1923 = vmul.f32 %v1853, %v1917
    %v1924 = vmul.f32 %v1854, %v1916
    %v1925 = vmul.f32 %v1855, %v1917
    %v1926 = vmul.f32 %v1856, %v1916
    %v1927 = vmul.f32 %v1857, %v1917
    %v1928 = vmul.f32 %v1858, %v1916
    %v1929 = vmul.f32 %v1859, %v1917
    %v1930 = vmul.f32 %v1860, %v1916
    %v1931 = vmul.f32 %v1861, %v1917
    %v1932 = vmul.f32 %v1862, %v1916
    %v1933 = vmul.f32 %v1863, %v1917
    %v1934 = vmul.f32 %v1864, %v1916
    %v1935 = vmul.f32 %v1865, %v1917
    %v1936 = vmul.f32 %v1866, %v1916
    %v1937 = vmul.f32 %v1867, %v1917
    %v1938 = vmul.f32 %v1868, %v1916
    %v1939 = vmul.f32 %v1869, %v1917
    %v1940 = vmul.f32 %v1870, %v1916
    %v1941 = vmul.f32 %v1871, %v1917
    %v1942 = vmul.f32 %v1872, %v1916
    %v1943 = vmul.f32 %v1873, %v1917
    %v1944 = vmul.f32 %v1874, %v1916
    %v1945 = vmul.f32 %v1875, %v1917
    %v1946 = vmul.f32 %v1876, %v1916
    %v1947 = vmul.f32 %v1877, %v1917
    %v1948 = vmul.f32 %v1878, %v1916
    %v1949 = vmul.f32 %v1879, %v1917
    %v1950 = vmul.f32 %v1880, %v1916
    %v1951 = vmul.f32 %v1881, %v1917
    %v1952 = vmul.f32 %v1882, %v1916
    %v1953 = vmul.f32 %v1883, %v1917
    %v1954 = vmul.f32 %v1884, %v1916
    %v1955 = vmul.f32 %v1885, %v1917
    %v1956 = vmul.f32 %v1886, %v1916
    %v1957 = vmul.f32 %v1887, %v1917
    %v1958 = vmul.f32 %v1888, %v1916
    %v1959 = vmul.f32 %v1889, %v1917
    %v1960 = vmul.f32 %v1890, %v1916
    %v1961 = vmul.f32 %v1891, %v1917
    %v1962 = vmul.f32 %v1892, %v1916
    %v1963 = vmul.f32 %v1893, %v1917
    %v1964 = vmul.f32 %v1894, %v1916
    %v1965 = vmul.f32 %v1895, %v1917
    %v1966 = vmul.f32 %v1896, %v1916
    %v1967 = vmul.f32 %v1897, %v1917
    %v1968 = vmul.f32 %v1898, %v1916
    %v1969 = vmul.f32 %v1899, %v1917
    %v1970 = vmul.f32 %v1900, %v1916
    %v1971 = vmul.f32 %v1901, %v1917
    %v1972 = vmul.f32 %v1902, %v1916
    %v1973 = vmul.f32 %v1903, %v1917
    %v1974 = vmul.f32 %v1904, %v1916
    %v1975 = vmul.f32 %v1905, %v1917
    %v1976 = vmul.f32 %v1906, %v1916
    %v1977 = vmul.f32 %v1907, %v1917
    %v1978 = vmul.f32 %v1908, %v1916
    %v1979 = vmul.f32 %v1909, %v1917
    %v1980 = vmul.f32 %v1910, %v1916
    %v1981 = vmul.f32 %v1911, %v1917
    %v1982 = vmul.f32 %v1912, %v1916
    %v1983 = vmul.f32 %v1913, %v1917
    %v1984 = vadd.f32 %v1920, %v1921
    %1985 = vadd.xlane.f32.xlu0 %v1984
    %v1986 = vpop.xlane.xlu0 %1985
    %v1987 = vadd.f32 %v1922, %v1923
    %1988 = vadd.xlane.f32.xlu0 %v1987
    %v1989 = vpop.xlane.xlu0 %1988
    %v1990 = vadd.f32 %v1924, %v1925
    %1991 = vadd.xlane.f32.xlu0 %v1990
    %v1992 = vpop.xlane.xlu0 %1991
    %v1993 = vadd.f32 %v1926, %v1927
    %1994 = vadd.xlane.f32.xlu0 %v1993
    %v1995 = vpop.xlane.xlu0 %1994
    %v1996 = vadd.f32 %v1928, %v1929
    %1997 = vadd.xlane.f32.xlu0 %v1996
    %v1998 = vpop.xlane.xlu0 %1997
    %v1999 = vadd.f32 %v1930, %v1931
    %2000 = vadd.xlane.f32.xlu0 %v1999
    %v2001 = vpop.xlane.xlu0 %2000
    %v2002 = vadd.f32 %v1932, %v1933
    %2003 = vadd.xlane.f32.xlu0 %v2002
    %v2004 = vpop.xlane.xlu0 %2003
    %v2005 = vadd.f32 %v1934, %v1935
    %2006 = vadd.xlane.f32.xlu0 %v2005
    %v2007 = vpop.xlane.xlu0 %2006
    %v2008 = vadd.f32 %v1936, %v1937
    %2009 = vadd.xlane.f32.xlu0 %v2008
    %v2010 = vpop.xlane.xlu0 %2009
    %v2011 = vadd.f32 %v1938, %v1939
    %2012 = vadd.xlane.f32.xlu0 %v2011
    %v2013 = vpop.xlane.xlu0 %2012
    %v2014 = vadd.f32 %v1940, %v1941
    %2015 = vadd.xlane.f32.xlu0 %v2014
    %v2016 = vpop.xlane.xlu0 %2015
    %v2017 = vadd.f32 %v1942, %v1943
    %2018 = vadd.xlane.f32.xlu0 %v2017
    %v2019 = vpop.xlane.xlu0 %2018
    %v2020 = vadd.f32 %v1944, %v1945
    %2021 = vadd.xlane.f32.xlu0 %v2020
    %v2022 = vpop.xlane.xlu0 %2021
    %v2023 = vadd.f32 %v1946, %v1947
    %2024 = vadd.xlane.f32.xlu0 %v2023
    %v2025 = vpop.xlane.xlu0 %2024
    %v2026 = vadd.f32 %v1948, %v1949
    %2027 = vadd.xlane.f32.xlu0 %v2026
    %v2028 = vpop.xlane.xlu0 %2027
    %v2029 = vadd.f32 %v1950, %v1951
    %2030 = vadd.xlane.f32.xlu0 %v2029
    %v2031 = vpop.xlane.xlu0 %2030
    %v2032 = vadd.f32 %v1952, %v1953
    %2033 = vadd.xlane.f32.xlu0 %v2032
    %v2034 = vpop.xlane.xlu0 %2033
    %v2035 = vadd.f32 %v1954, %v1955
    %2036 = vadd.xlane.f32.xlu0 %v2035
    %v2037 = vpop.xlane.xlu0 %2036
    %v2038 = vadd.f32 %v1956, %v1957
    %2039 = vadd.xlane.f32.xlu0 %v2038
    %v2040 = vpop.xlane.xlu0 %2039
    %v2041 = vadd.f32 %v1958, %v1959
    %2042 = vadd.xlane.f32.xlu0 %v2041
    %v2043 = vpop.xlane.xlu0 %2042
    %v2044 = vadd.f32 %v1960, %v1961
    %2045 = vadd.xlane.f32.xlu0 %v2044
    %v2046 = vpop.xlane.xlu0 %2045
    %v2047 = vadd.f32 %v1962, %v1963
    %2048 = vadd.xlane.f32.xlu0 %v2047
    %v2049 = vpop.xlane.xlu0 %2048
    %v2050 = vadd.f32 %v1964, %v1965
    %2051 = vadd.xlane.f32.xlu0 %v2050
    %v2052 = vpop.xlane.xlu0 %2051
    %v2053 = vadd.f32 %v1966, %v1967
    %2054 = vadd.xlane.f32.xlu0 %v2053
    %v2055 = vpop.xlane.xlu0 %2054
    %v2056 = vadd.f32 %v1968, %v1969
    %2057 = vadd.xlane.f32.xlu0 %v2056
    %v2058 = vpop.xlane.xlu0 %2057
    %v2059 = vadd.f32 %v1970, %v1971
    %2060 = vadd.xlane.f32.xlu0 %v2059
    %v2061 = vpop.xlane.xlu0 %2060
    %v2062 = vadd.f32 %v1972, %v1973
    %2063 = vadd.xlane.f32.xlu0 %v2062
    %v2064 = vpop.xlane.xlu0 %2063
    %v2065 = vadd.f32 %v1974, %v1975
    %2066 = vadd.xlane.f32.xlu0 %v2065
    %v2067 = vpop.xlane.xlu0 %2066
    %v2068 = vadd.f32 %v1976, %v1977
    %2069 = vadd.xlane.f32.xlu0 %v2068
    %v2070 = vpop.xlane.xlu0 %2069
    %v2071 = vadd.f32 %v1978, %v1979
    %2072 = vadd.xlane.f32.xlu0 %v2071
    %v2073 = vpop.xlane.xlu0 %2072
    %v2074 = vadd.f32 %v1980, %v1981
    %2075 = vadd.xlane.f32.xlu0 %v2074
    %v2076 = vpop.xlane.xlu0 %2075
    %v2077 = vadd.f32 %v1982, %v1983
    %2078 = vadd.xlane.f32.xlu0 %v2077
    %v2079 = vpop.xlane.xlu0 %2078
    %v2080 = vld [vmem:[#allocation2] sm:$0x1]
    %v2082 = vperm.slane %v2080, 0
    %v2084 = vadd.f32 %v1986, %v2082
    %v2085 = vadd.f32 %v1989, %v2082
    %v2086 = vadd.f32 %v1992, %v2082
    %v2087 = vadd.f32 %v1995, %v2082
    %v2088 = vadd.f32 %v1998, %v2082
    %v2089 = vadd.f32 %v2001, %v2082
    %v2090 = vadd.f32 %v2004, %v2082
    %v2091 = vadd.f32 %v2007, %v2082
    %v2092 = vadd.f32 %v2010, %v2082
    %v2093 = vadd.f32 %v2013, %v2082
    %v2094 = vadd.f32 %v2016, %v2082
    %v2095 = vadd.f32 %v2019, %v2082
    %v2096 = vadd.f32 %v2022, %v2082
    %v2097 = vadd.f32 %v2025, %v2082
    %v2098 = vadd.f32 %v2028, %v2082
    %v2099 = vadd.f32 %v2031, %v2082
    %v2100 = vadd.f32 %v2034, %v2082
    %v2101 = vadd.f32 %v2037, %v2082
    %v2102 = vadd.f32 %v2040, %v2082
    %v2103 = vadd.f32 %v2043, %v2082
    %v2104 = vadd.f32 %v2046, %v2082
    %v2105 = vadd.f32 %v2049, %v2082
    %v2106 = vadd.f32 %v2052, %v2082
    %v2107 = vadd.f32 %v2055, %v2082
    %v2108 = vadd.f32 %v2058, %v2082
    %v2109 = vadd.f32 %v2061, %v2082
    %v2110 = vadd.f32 %v2064, %v2082
    %v2111 = vadd.f32 %v2067, %v2082
    %v2112 = vadd.f32 %v2070, %v2082
    %v2113 = vadd.f32 %v2073, %v2082
    %v2114 = vadd.f32 %v2076, %v2082
    %v2115 = vadd.f32 %v2079, %v2082
    %vm2116 = vcmask 7168
    %2117 = vst.msk [vmem:[%s7] sm:$0xff] %vm2116, %v2084
    %2118 = vst.msk [vmem:[%s7 + $0x8] sm:$0xff] %vm2116, %v2085
    %2119 = vst.msk [vmem:[%s7 + $0x10] sm:$0xff] %vm2116, %v2086
    %2120 = vst.msk [vmem:[%s7 + $0x18] sm:$0xff] %vm2116, %v2087
    %2121 = vst.msk [vmem:[%s7 + $0x20] sm:$0xff] %vm2116, %v2088
    %2122 = vst.msk [vmem:[%s7 + $0x28] sm:$0xff] %vm2116, %v2089
    %2123 = vst.msk [vmem:[%s7 + $0x30] sm:$0xff] %vm2116, %v2090
    %2124 = vst.msk [vmem:[%s7 + $0x38] sm:$0xff] %vm2116, %v2091
    %2125 = vst.msk [vmem:[%s7 + $0x40] sm:$0xff] %vm2116, %v2092
    %2126 = vst.msk [vmem:[%s7 + $0x48] sm:$0xff] %vm2116, %v2093
    %2127 = vst.msk [vmem:[%s7 + $0x50] sm:$0xff] %vm2116, %v2094
    %2128 = vst.msk [vmem:[%s7 + $0x58] sm:$0xff] %vm2116, %v2095
    %2129 = vst.msk [vmem:[%s7 + $0x60] sm:$0xff] %vm2116, %v2096
    %2130 = vst.msk [vmem:[%s7 + $0x68] sm:$0xff] %vm2116, %v2097
    %2131 = vst.msk [vmem:[%s7 + $0x70] sm:$0xff] %vm2116, %v2098
    %2132 = vst.msk [vmem:[%s7 + $0x78] sm:$0xff] %vm2116, %v2099
    %2133 = vst.msk [vmem:[%s7 + $0x80] sm:$0xff] %vm2116, %v2100
    %2134 = vst.msk [vmem:[%s7 + $0x88] sm:$0xff] %vm2116, %v2101
    %2135 = vst.msk [vmem:[%s7 + $0x90] sm:$0xff] %vm2116, %v2102
    %2136 = vst.msk [vmem:[%s7 + $0x98] sm:$0xff] %vm2116, %v2103
    %2137 = vst.msk [vmem:[%s7 + $0xa0] sm:$0xff] %vm2116, %v2104
    %2138 = vst.msk [vmem:[%s7 + $0xa8] sm:$0xff] %vm2116, %v2105
    %2139 = vst.msk [vmem:[%s7 + $0xb0] sm:$0xff] %vm2116, %v2106
    %2140 = vst.msk [vmem:[%s7 + $0xb8] sm:$0xff] %vm2116, %v2107
    %2141 = vst.msk [vmem:[%s7 + $0xc0] sm:$0xff] %vm2116, %v2108
    %2142 = vst.msk [vmem:[%s7 + $0xc8] sm:$0xff] %vm2116, %v2109
    %2143 = vst.msk [vmem:[%s7 + $0xd0] sm:$0xff] %vm2116, %v2110
    %2144 = vst.msk [vmem:[%s7 + $0xd8] sm:$0xff] %vm2116, %v2111
    %2145 = vst.msk [vmem:[%s7 + $0xe0] sm:$0xff] %vm2116, %v2112
    %2146 = vst.msk [vmem:[%s7 + $0xe8] sm:$0xff] %vm2116, %v2113
    %2147 = vst.msk [vmem:[%s7 + $0xf0] sm:$0xff] %vm2116, %v2114
    %2148 = vst.msk [vmem:[%s7 + $0xf8] sm:$0xff] %vm2116, %v2115
    // Predicated region
    $region34: #{tpu_custom_call.1} parent=1 // pred_check
      _
    $region35: #{tpu_custom_call.1} parent=1 // pred_check_branch
      %2150 = sbr.rel (0) target = $region37
    $region36: #{tpu_custom_call.1} parent=1 // pred_region
      _
    $region37: #{tpu_custom_call.1} parent=1 // pred_fallthru
      _
    // Predicated region
    $region38: #{tpu_custom_call.1} parent=1 // pred_check
      _
    $region39: #{tpu_custom_call.1} parent=1 // pred_check_branch
      %2152 = sbr.rel (0) target = $region41
    $region40: #{tpu_custom_call.1} parent=1 // pred_region
      _
    $region41: #{tpu_custom_call.1} parent=1 // pred_fallthru
      _
    %2153 = vsyncpa [#allocation4], 1

</llo_original>
